<compile_context>
chip_gen: v5e
topology: v5e:2x2
jax: 0.10.0
libtpu: 0.0.40
codegen_flags: <defaults>
</compile_context>

<pallas_src>
import functools

import jax
import jax.numpy as jnp
from jax.experimental import pallas as pl
from jax.experimental.pallas import tpu as pltpu


def _contrast_kernel(z_ref, zp_ref, zn_ref, out_ref, *, margin: float, rem: int):
    """One grid step: lane-dense partial sum of the per-row margin losses."""
    z = z_ref[...].astype(jnp.float32)
    zp = zp_ref[...].astype(jnp.float32)
    zn = zn_ref[...].astype(jnp.float32)

    d = z.shape[-1]
    ones_col = jnp.ones((d, 1), dtype=jnp.float32)

    # Row-wise dot products.  The D-reduction runs on the otherwise idle MXU
    # instead of an XLU rotate-reduce chain: (tile_rows, d) @ (d, 1) -> (tile_rows, 1).
    # HIGHEST precision keeps full f32 accuracy (matches a plain f32 sum).
    sim_pos = jnp.dot(z * zp, ones_col,
                      precision=jax.lax.Precision.HIGHEST,
                      preferred_element_type=jnp.float32)
    sim_neg = jnp.dot(z * zn, ones_col,
                      precision=jax.lax.Precision.HIGHEST,
                      preferred_element_type=jnp.float32)

    sp = jax.nn.sigmoid(sim_pos)
    sn = jax.nn.sigmoid(sim_neg)

    # MarginRankingLoss with the module's all-ones target (y == +1):
    #   max(0, -y*(sp - sn) + margin) == max(0, (sn - sp) + margin)
    per_row = jnp.maximum(sn - sp + jnp.float32(margin), 0.0)

    def write(total):
        # Lane-dense per-tile partial sum (full (8,128) vreg, unmasked store);
        # the wrapper reads element [i, 0, 0] of each tile.
        out_ref[...] = jnp.broadcast_to(total, (1, 8, 128)).astype(jnp.float32)

    if rem == 0:
        # n is an exact multiple of tile_rows: no ragged tail, no mask anywhere.
        write(jnp.sum(per_row))
    else:
        i = pl.program_id(0)
        last = pl.num_programs(0) - 1

        @pl.when(i != last)
        def _():
            write(jnp.sum(per_row))

        @pl.when(i == last)
        def _():
            # Ragged tail tile: only the first `rem` rows of the block are real
            # data (no wrapper-side padding), so mask the rest before summing.
            row = jax.lax.broadcasted_iota(jnp.int32, per_row.shape, 0)
            write(jnp.sum(jnp.where(row < rem, per_row, 0.0)))


def _round_up(x: int, m: int) -> int:
    return (x + m - 1) // m * m


def _cdiv(a: int, b: int) -> int:
    return (a + b - 1) // b


def contrast_loss(z, z_pos, z_neg, ones=None, *, margin=0.8, tile_rows=None):
    """Pallas TPU implementation of Contrast.forward.

    `ones` (the module's all-ones MarginRankingLoss target) is accepted for API
    parity but constant-folded to y = +1 inside the kernel; passing a non-all-ones
    target would diverge from the PyTorch reference.
    """
    del ones  # all-ones target is folded into the kernel math
    n, d = z.shape
    itemsize = jnp.dtype(z.dtype).itemsize

    # Sublane packing granularity: 8 rows for 32-bit, 16 for bf16, 32 for int8.
    sublane = max(8, 32 // itemsize)

    # VMEM budget: 48 MiB is safe on every generation (v7x has 64 MiB per TC);
    # clamp the tile to the budget instead of clamping the limit.
    vmem_budget = 48 << 20
    slack = 4 << 20  # compiler scratch + output blocks
    per_row_buffered = 3 * 2 * d * itemsize  # 3 inputs x 2 pipeline buffers
    max_rows_vmem = ((vmem_budget - slack) // max(per_row_buffered, 1)) // sublane * sublane
    if max_rows_vmem < sublane:
        # TODO(synk): block the D axis on a second "arbitrary" grid dimension
        # with a per-row accumulator for extremely large feature dims.
        raise ValueError(
            f"feature dim d={d} too large: even a {sublane}-row block does not "
            f"fit the {vmem_budget >> 20} MiB VMEM budget")

    if tile_rows is None:
        # ~4 MiB per input block: big enough to amortize per-grid-step overhead
        # (important on v7x at ~3.2 TB/s), 3 inputs x 2 buffers = 24 MiB << budget.
        target_bytes = 4 << 20
        tile_rows = max(sublane,
                        (target_bytes // max(d * itemsize, 1)) // sublane * sublane)
    else:
        tile_rows = max(sublane, _round_up(int(tile_rows), sublane))

    # Keep at least 2 grid steps when possible so the single "parallel" grid
    # axis can feed both TensorCores on v7x.
    tile_rows = min(tile_rows, max(sublane, _round_up(_cdiv(n, 2), sublane)))
    tile_rows = min(tile_rows, max_rows_vmem)

    num_tiles = _cdiv(n, tile_rows)
    rem = n % tile_rows  # rows valid in the (possibly ragged) last tile; 0 = exact fit

    kernel = functools.partial(_contrast_kernel, margin=float(margin), rem=rem)

    vmem_need = 3 * 2 * tile_rows * d * itemsize + slack
    vmem_limit = int(min(max(vmem_need, 32 << 20), vmem_budget))

    cost = pl.CostEstimate(
        flops=6 * n * d,
        transcendentals=2 * n,
        bytes_accessed=3 * n * d * itemsize + num_tiles * 8 * 128 * 4,
    )

    partials = pl.pallas_call(
        kernel,
        out_shape=jax.ShapeDtypeStruct((num_tiles, 8, 128), jnp.float32),
        grid_spec=pltpu.PrefetchScalarGridSpec(
            num_scalar_prefetch=0,
            grid=(num_tiles,),
            in_specs=[
                pl.BlockSpec((tile_rows, d), lambda i: (i, 0)),
                pl.BlockSpec((tile_rows, d), lambda i: (i, 0)),
                pl.BlockSpec((tile_rows, d), lambda i: (i, 0)),
            ],
            out_specs=pl.BlockSpec((1, 8, 128), lambda i: (i, 0, 0)),
        ),
        compiler_params=pltpu.CompilerParams(
            dimension_semantics=("parallel",),
            vmem_limit_bytes=vmem_limit,
        ),
        cost_estimate=cost,
    )(z, z_pos, z_neg)

    # Each tile's partial sum is replicated across its (8, 128) block; take one
    # element per tile and finish the mean outside the kernel.
    return jnp.sum(partials[:, 0, 0]) / jnp.float32(n)


def contrast_loss_ref(z, z_pos, z_neg, ones, *, margin=0.8):
    sim_pos = jnp.sum(z * z_pos, axis=-1)
    sim_neg = jnp.sum(z * z_neg, axis=-1)
    sp = jax.nn.sigmoid(sim_pos)
    sn = jax.nn.sigmoid(sim_neg)
    return jnp.mean(jnp.maximum(-ones * (sp - sn) + margin, 0.0))


if __name__ == "__main__":
    N, D = 200, 128
    key = jax.random.PRNGKey(0)
    k1, k2, k3 = jax.random.split(key, 3)
    z = jax.random.normal(k1, (N, D), dtype=jnp.float32)
    z_pos = jax.random.normal(k2, (N, D), dtype=jnp.float32)
    z_neg = jax.random.normal(k3, (N, D), dtype=jnp.float32)
    # Module buffer `self.ones` (all-ones MarginRankingLoss target).
    ones = jnp.ones((N,), dtype=jnp.float32)

    ref = contrast_loss_ref(z, z_pos, z_neg, ones, margin=0.8)

    # Auto tile size: 2 parallel tiles (104 + ragged 96-row tail), no padding.
    loss = jax.block_until_ready(contrast_loss(z, z_pos, z_neg, ones, margin=0.8))
    assert jnp.allclose(loss, ref, rtol=1e-5, atol=1e-6), (loss, ref)

    # Forced small tiles: multi-tile parallel grid + masked ragged last tile
    # (200 rows, 64-row tiles -> rem = 8).
    loss_tiled = jax.block_until_ready(
        contrast_loss(z, z_pos, z_neg, ones, margin=0.8, tile_rows=64))
    assert jnp.allclose(loss_tiled, ref, rtol=1e-5, atol=1e-6), (loss_tiled, ref)

    # Exact-multiple batch: exercises the trace-time mask-free path (rem == 0).
    ref_exact = contrast_loss_ref(z[:192], z_pos[:192], z_neg[:192], ones[:192],
                                  margin=0.8)
    loss_exact = jax.block_until_ready(
        contrast_loss(z[:192], z_pos[:192], z_neg[:192], ones[:192],
                      margin=0.8, tile_rows=96))
    assert jnp.allclose(loss_exact, ref_exact, rtol=1e-5, atol=1e-6), (loss_exact, ref_exact)

    print("KERNEL_OK")
</pallas_src>

<mosaic_0001>
module attributes {stable_mosaic.version = 11 : i64} {
  func.func @_contrast_kernel(%arg0: i32, %arg1: memref<104x128xf32, #tpu.memory_space<vmem>>, %arg2: memref<104x128xf32, #tpu.memory_space<vmem>>, %arg3: memref<104x128xf32, #tpu.memory_space<vmem>>, %arg4: memref<1x8x128xf32, #tpu.memory_space<vmem>>) attributes {dimension_semantics = [#tpu.dimension_semantics<parallel>], iteration_bounds = array<i64: 2>, scalar_prefetch = 0 : i64, scratch_operands = 0 : i64, tpu.core_type = #tpu.core_type<tc>, window_params = [{transform_indices = @transform_0, window_bounds = array<i64: 104, 128>}, {transform_indices = @transform_1, window_bounds = array<i64: 104, 128>}, {transform_indices = @transform_2, window_bounds = array<i64: 104, 128>}, {transform_indices = @transform_3, window_bounds = array<i64: 1, 8, 128>}]} {
    %c0 = arith.constant 0 : index
    %c0_0 = arith.constant 0 : index
    %0 = vector.load %arg1[%c0, %c0_0] : memref<104x128xf32, #tpu.memory_space<vmem>>, vector<104x128xf32>
    %c0_1 = arith.constant 0 : index
    %c0_2 = arith.constant 0 : index
    %1 = vector.load %arg2[%c0_1, %c0_2] : memref<104x128xf32, #tpu.memory_space<vmem>>, vector<104x128xf32>
    %c0_3 = arith.constant 0 : index
    %c0_4 = arith.constant 0 : index
    %2 = vector.load %arg3[%c0_3, %c0_4] : memref<104x128xf32, #tpu.memory_space<vmem>>, vector<104x128xf32>
    %cst = arith.constant 1.000000e+00 : f32
    %3 = vector.broadcast %cst : f32 to vector<128x1xf32>
    %4 = arith.mulf %0, %1 : vector<104x128xf32>
    %cst_5 = arith.constant dense<0.000000e+00> : vector<104x1xf32>
    %5 = tpu.matmul %4, %3, %cst_5 {dimension_numbers = #tpu.dot_dimension_numbers<[1], [0], [0], [1], [0, 0, 1, 1], [], []>, precision = #tpu.contract_precision<fp32>} : vector<104x128xf32>, vector<128x1xf32>, vector<104x1xf32> -> vector<104x1xf32>
    %6 = arith.mulf %0, %2 : vector<104x128xf32>
    %cst_6 = arith.constant dense<0.000000e+00> : vector<104x1xf32>
    %7 = tpu.matmul %6, %3, %cst_6 {dimension_numbers = #tpu.dot_dimension_numbers<[1], [0], [0], [1], [0, 0, 1, 1], [], []>, precision = #tpu.contract_precision<fp32>} : vector<104x128xf32>, vector<128x1xf32>, vector<104x1xf32> -> vector<104x1xf32>
    %8 = arith.negf %5 : vector<104x1xf32>
    %9 = math.exp %8 : vector<104x1xf32>
    %cst_7 = arith.constant 1.000000e+00 : f32
    %10 = vector.broadcast %cst_7 : f32 to vector<104x1xf32>
    %11 = arith.addf %10, %9 : vector<104x1xf32>
    %12 = arith.divf %10, %11 : vector<104x1xf32>
    %13 = arith.negf %7 : vector<104x1xf32>
    %14 = math.exp %13 : vector<104x1xf32>
    %cst_8 = arith.constant 1.000000e+00 : f32
    %15 = vector.broadcast %cst_8 : f32 to vector<104x1xf32>
    %16 = arith.addf %15, %14 : vector<104x1xf32>
    %17 = arith.divf %15, %16 : vector<104x1xf32>
    %18 = arith.subf %17, %12 : vector<104x1xf32>
    %cst_9 = arith.constant 8.000000e-01 : f32
    %19 = vector.broadcast %cst_9 : f32 to vector<104x1xf32>
    %20 = arith.addf %18, %19 : vector<104x1xf32>
    %cst_10 = arith.constant 0.000000e+00 : f32
    %21 = vector.broadcast %cst_10 : f32 to vector<104x1xf32>
    %22 = arith.maximumf %20, %21 : vector<104x1xf32>
    %c1_i32 = arith.constant 1 : i32
    %23 = arith.cmpi ne, %arg0, %c1_i32 : i32
    %24 = arith.extui %23 : i1 to i32
    %c0_i32 = arith.constant 0 : i32
    %25 = arith.cmpi ne, %24, %c0_i32 : i32
    scf.if %25 {
      %29 = vector.shape_cast %22 : vector<104x1xf32> to vector<1x104x1xf32>
      %cst_13 = arith.constant dense<0.000000e+00> : vector<1xf32>
      %30 = vector.multi_reduction <add>, %29, %cst_13 [1, 2] : vector<1x104x1xf32> to vector<1xf32>
      %31 = vector.shape_cast %30 : vector<1xf32> to vector<1x1x1xf32>
      %32 = vector.extract %31[0, 0, 0] : f32 from vector<1x1x1xf32>
      %33 = vector.broadcast %32 : f32 to vector<1x8x128xf32>
      %c0_14 = arith.constant 0 : index
      %c0_15 = arith.constant 0 : index
      %c0_16 = arith.constant 0 : index
      %34 = vector.load %arg4[%c0_14, %c0_15, %c0_16] : memref<1x8x128xf32, #tpu.memory_space<vmem>>, vector<1x8x128xf32>
      tpu.vector_store %arg4[%c0_14, %c0_15, %c0_16], %33 {strides = array<i32>} : memref<1x8x128xf32, #tpu.memory_space<vmem>>, vector<1x8x128xf32>,
    } else {
    }
    %c1_i32_11 = arith.constant 1 : i32
    %26 = arith.cmpi eq, %arg0, %c1_i32_11 : i32
    %27 = arith.extui %26 : i1 to i32
    %c0_i32_12 = arith.constant 0 : i32
    %28 = arith.cmpi ne, %27, %c0_i32_12 : i32
    scf.if %28 {
      %29 = tpu.iota {dimensions = array<i32: 0>} : vector<104x1xi32>
      %c96_i32 = arith.constant 96 : i32
      %30 = vector.broadcast %c96_i32 : i32 to vector<104x1xi32>
      %31 = arith.cmpi slt, %29, %30 : vector<104x1xi32>
      %cst_13 = arith.constant 0.000000e+00 : f32
      %32 = vector.broadcast %cst_13 : f32 to vector<104x1xf32>
      %33 = arith.select %31, %22, %32 : vector<104x1xi1>, vector<104x1xf32>
      %34 = vector.shape_cast %33 : vector<104x1xf32> to vector<1x104x1xf32>
      %cst_14 = arith.constant dense<0.000000e+00> : vector<1xf32>
      %35 = vector.multi_reduction <add>, %34, %cst_14 [1, 2] : vector<1x104x1xf32> to vector<1xf32>
      %36 = vector.shape_cast %35 : vector<1xf32> to vector<1x1x1xf32>
      %37 = vector.extract %36[0, 0, 0] : f32 from vector<1x1x1xf32>
      %38 = vector.broadcast %37 : f32 to vector<1x8x128xf32>
      %c0_15 = arith.constant 0 : index
      %c0_16 = arith.constant 0 : index
      %c0_17 = arith.constant 0 : index
      %39 = vector.load %arg4[%c0_15, %c0_16, %c0_17] : memref<1x8x128xf32, #tpu.memory_space<vmem>>, vector<1x8x128xf32>
      tpu.vector_store %arg4[%c0_15, %c0_16, %c0_17], %38 {strides = array<i32>} : memref<1x8x128xf32, #tpu.memory_space<vmem>>, vector<1x8x128xf32>,
    } else {
    }
    return
  }
  func.func @transform_0(%arg0: i32) -> (i32, i32) {
    %c0_i32 = arith.constant 0 : i32
    %c0_i32_0 = arith.constant 0 : i32
    return %arg0, %c0_i32 : i32, i32
  }
  func.func @transform_1(%arg0: i32) -> (i32, i32) {
    %c0_i32 = arith.constant 0 : i32
    %c0_i32_0 = arith.constant 0 : i32
    return %arg0, %c0_i32 : i32, i32
  }
  func.func @transform_2(%arg0: i32) -> (i32, i32) {
    %c0_i32 = arith.constant 0 : i32
    %c0_i32_0 = arith.constant 0 : i32
    return %arg0, %c0_i32 : i32, i32
  }
  func.func @transform_3(%arg0: i32) -> (i32, i32, i32) {
    %c0_i32 = arith.constant 0 : i32
    %c0_i32_0 = arith.constant 0 : i32
    %c0_i32_1 = arith.constant 0 : i32
    return %arg0, %c0_i32, %c0_i32_0 : i32, i32, i32
  }
}

</mosaic_0001>

<llo_original>
// kernel: tpu_custom_call.1
$region0: #{tpu_custom_call.1}
  #allocation0 [shape = 'u32[]', space=smem, size = 0x4, offset = 0x4, fixed_abs, tag = 'smem constant byte address 0x4 - core index']
  #allocation1 [shape = 'u32[72,128]{1,0:T(1,128)}', space=vmem, size = 0x9000, scoped, tag = 'internal scratch']
  %s0 = inlined_call_operand.hbm [shape: f32[200,128], index: 0, kind: input, shape index: {}]
  %s1 = inlined_call_operand.hbm [shape: f32[200,128], index: 1, kind: input, shape index: {}]
  %s2 = inlined_call_operand.hbm [shape: f32[200,128], index: 2, kind: input, shape index: {}]
  %s3 = inlined_call_operand.hbm [shape: f32[2,8,128], index: 3, kind: output, shape index: {}]
  %s4 = sld [smem:[#allocation0]]
  $region65: #{tpu_custom_call.1} parent=0
    _
  %s6 = ssub.s32 1, %s4
  %s7 = scalar_select 0, %s6, %s4
  $region1: #{tpu_custom_call.1} parent=0
    #allocation2 [shape = 'u8[106496]{0}', space=vmem, size = 0x1a000, scoped, tag = 'input window, operand 0']
    #allocation3 [shape = 's32[2]{0}', space=sflag, size = 0x8, scoped, tag = 'scoped memory for tpu_custom_call.1']
    #allocation4 [shape = 's32[2]{0}', space=sflag, size = 0x8, scoped, tag = 'scoped memory for tpu_custom_call.1']
    #allocation5 [shape = 'u8[106496]{0}', space=vmem, size = 0x1a000, scoped, tag = 'input window, operand 1']
    #allocation6 [shape = 's32[2]{0}', space=sflag, size = 0x8, scoped, tag = 'scoped memory for tpu_custom_call.1']
    #allocation7 [shape = 'u8[106496]{0}', space=vmem, size = 0x1a000, scoped, tag = 'input window, operand 2']
    #allocation8 [shape = 'u8[8192]{0}', space=vmem, size = 0x2000, scoped, tag = 'output window, operand 0']
    %8 = vsyncpa [#allocation3], 0
    %s9 = scalar_lea.sflag [#allocation3], 1
    %10 = vsyncpa %s9, 0
    %11 = vsyncpa [#allocation6], 0
    %s12 = scalar_lea.sflag [#allocation6], 1
    %13 = vsyncpa %s12, 0
    %14 = vsyncpa [#allocation4], 0
    %s15 = scalar_lea.sflag [#allocation4], 1
    %16 = vsyncpa %s15, 0
    loop: start=0, step=1, limit=4
    $region2: #{tpu_custom_call.1} parent=1 // loop_pre_header
      _
    $region3: #{tpu_custom_call.1} parent=1 // loop_header
      %s18 = sphi 0, %s22
      %p19 = scmp.ge.s32.totalorder %s18, 4
      %s28 = sphi 0, %s30
      %s31 = sphi 0, %s28
      %s32 = sphi 0, %s31
      %s48 = sphi 0, %s32
      %s54 = sphi 0, %s56
      %s57 = sphi 0, %s54
      %s58 = sphi 0, %s57
      %s74 = sphi 0, %s58
      %s80 = sphi 0, %s82
      %s83 = sphi 0, %s80
      %s84 = sphi 0, %s83
      %s100 = sphi 0, %s84
      %s106 = sphi 0, %s108
      %s109 = sphi 0, %s106
      %s110 = sphi 0, %s109
      %s126 = sphi 0, %s110
    $region4: #{tpu_custom_call.1} parent=1 // loop_header_branch
      %21 = sbr.rel (%p19) target = $region8
    $region5: #{tpu_custom_call.1} parent=1 // loop_body
      %s23 = ssub.s32 %s18, 1
      %s24 = ssub.s32 %s18, 2
      %s25 = sadd.s32 %s18, 1
      %s26 = ssub.s32 %s18, %s25
      %p27 = scmp.eq.s32.totalorder %s26, 0
      %s29 = sadd.s32 %s28, 1
      %s30 = scalar_select %p27, %s28, %s29
      %p33 = pneg %p27
      %p34 = scmp.eq.s32.totalorder %s18, 1
      %p35 = por %p33, %p34
      %p36 = scmp.ne.s32.totalorder %s28, %s31
      %p37 = scmp.eq.s32.totalorder %s18, 0
      %p38 = por %p36, %p37
      %p39 = scmp.ne.s32.totalorder %s28, %s31
      %p40 = scmp.eq.s32.totalorder %s23, 1
      %p41 = por %p39, %p40
      %p42 = scmp.ne.s32.totalorder %s31, %s32
      %p43 = scmp.eq.s32.totalorder %s23, 0
      %p44 = por %p42, %p43
      %p45 = scmp.ne.s32.totalorder %s31, %s32
      %p46 = scmp.eq.s32.totalorder %s24, 1
      %p47 = por %p45, %p46
      %p49 = scmp.ne.s32.totalorder %s32, %s48
      %p50 = scmp.eq.s32.totalorder %s24, 0
      %p51 = por %p49, %p50
      %s52 = ssub.s32 %s18, %s25
      %p53 = scmp.eq.s32.totalorder %s52, 0
      %s55 = sadd.s32 %s54, 1
      %s56 = scalar_select %p53, %s54, %s55
      %p59 = pneg %p53
      %p60 = scmp.eq.s32.totalorder %s18, 1
      %p61 = por %p59, %p60
      %p62 = scmp.ne.s32.totalorder %s54, %s57
      %p63 = scmp.eq.s32.totalorder %s18, 0
      %p64 = por %p62, %p63
      %p65 = scmp.ne.s32.totalorder %s54, %s57
      %p66 = scmp.eq.s32.totalorder %s23, 1
      %p67 = por %p65, %p66
      %p68 = scmp.ne.s32.totalorder %s57, %s58
      %p69 = scmp.eq.s32.totalorder %s23, 0
      %p70 = por %p68, %p69
      %p71 = scmp.ne.s32.totalorder %s57, %s58
      %p72 = scmp.eq.s32.totalorder %s24, 1
      %p73 = por %p71, %p72
      %p75 = scmp.ne.s32.totalorder %s58, %s74
      %p76 = scmp.eq.s32.totalorder %s24, 0
      %p77 = por %p75, %p76
      %s78 = ssub.s32 %s18, %s25
      %p79 = scmp.eq.s32.totalorder %s78, 0
      %s81 = sadd.s32 %s80, 1
      %s82 = scalar_select %p79, %s80, %s81
      %p85 = pneg %p79
      %p86 = scmp.eq.s32.totalorder %s18, 1
      %p87 = por %p85, %p86
      %p88 = scmp.ne.s32.totalorder %s80, %s83
      %p89 = scmp.eq.s32.totalorder %s18, 0
      %p90 = por %p88, %p89
      %p91 = scmp.ne.s32.totalorder %s80, %s83
      %p92 = scmp.eq.s32.totalorder %s23, 1
      %p93 = por %p91, %p92
      %p94 = scmp.ne.s32.totalorder %s83, %s84
      %p95 = scmp.eq.s32.totalorder %s23, 0
      %p96 = por %p94, %p95
      %p97 = scmp.ne.s32.totalorder %s83, %s84
      %p98 = scmp.eq.s32.totalorder %s24, 1
      %p99 = por %p97, %p98
      %p101 = scmp.ne.s32.totalorder %s84, %s100
      %p102 = scmp.eq.s32.totalorder %s24, 0
      %p103 = por %p101, %p102
      %s104 = ssub.s32 %s18, %s25
      %p105 = scmp.eq.s32.totalorder %s104, 0
      %s107 = sadd.s32 %s106, 1
      %s108 = scalar_select %p105, %s106, %s107
      %p111 = pneg %p105
      %p112 = scmp.eq.s32.totalorder %s18, 1
      %p113 = por %p111, %p112
      %p114 = scmp.ne.s32.totalorder %s106, %s109
      %p115 = scmp.eq.s32.totalorder %s18, 0
      %p116 = por %p114, %p115
      %p117 = scmp.ne.s32.totalorder %s106, %s109
      %p118 = scmp.eq.s32.totalorder %s23, 1
      %p119 = por %p117, %p118
      %p120 = scmp.ne.s32.totalorder %s109, %s110
      %p121 = scmp.eq.s32.totalorder %s23, 0
      %p122 = por %p120, %p121
      %p123 = scmp.ne.s32.totalorder %s109, %s110
      %p124 = scmp.eq.s32.totalorder %s24, 1
      %p125 = por %p123, %p124
      %p127 = scmp.ne.s32.totalorder %s110, %s126
      %p128 = scmp.eq.s32.totalorder %s24, 0
      %p129 = por %p127, %p128
      %p130 = scmp.le.s32.totalorder 1, %s18
      %p131 = scmp.lt.s32.totalorder %s18, 3
      %p132 = pnand %p130, %p131
      %p133 = pneg %p132
      // Predicated region
      $region9: #{tpu_custom_call.1} parent=5 // pred_check
        _
      $region10: #{tpu_custom_call.1} parent=5 // pred_check_branch
        %135 = sbr.rel (%p132) target = $region12
      $region11: #{tpu_custom_call.1} parent=5 // pred_region
        %s136 = ssub.s32 %s18, 1
      $region12: #{tpu_custom_call.1} parent=5 // pred_fallthru
        _
      %p137 = scmp.lt.s32.totalorder %s18, 2
      // Predicated region
      $region13: #{tpu_custom_call.1} parent=5 // pred_check
        %p138 = pneg %p137
      $region14: #{tpu_custom_call.1} parent=5 // pred_check_branch
        %140 = sbr.rel (%p138) target = $region16
      $region15: #{tpu_custom_call.1} parent=5 // pred_region
        // Predicated region
        $region17: #{tpu_custom_call.1} parent=15 // pred_check
          %p141 = pneg %p38
        $region18: #{tpu_custom_call.1} parent=15 // pred_check_branch
          %143 = sbr.rel (%p141) target = $region20
        $region19: #{tpu_custom_call.1} parent=15 // pred_region
          %s144 = sand.u32 %s28, 1
          %s145 = scalar_lea.sflag [#allocation3], %s144
          %s146 = sand.u32 %s28, 1
          %s147 = smul.addr %s146, 104
          %s148 = scalar_lea.vmem [#allocation2], %s147
          %s149 = smul.u32 13, %s18
          %s150 = ssub.s32 25, %s149
          %p151 = scmp.lt.s32.totalorder %s150, 13
          %s152 = scalar_select %p151, %s150, 13
          %s153 = smul.u32 8, %s152
          %s154 = ssub.s32 104, %s153
          %s155 = sshll.u32 %s154, 4
          %156 = vsyncadd %s145, %s155
          %p157 = scmp.ne.s32.totalorder 0, %s153
          %s158 = smul.addr %s149, 8
          %s159 = scalar_lea.hbm %s0, %s158
          %s160 = smul.u32 8, %s152
          %s161 = sshll.u32 %s159, 4
          %s162 = int_to_ptr.hbm [resolvable:$true] %s161
          %s163 = sshll.u32 %s148, 4
          %s164 = int_to_ptr.vmem [resolvable:$true] %s163
          %s165 = sshll.u32 %s160, 4
          %169 = dma.hbm_to_vmem [thread:$0]  (%p157), %s162, %s165, %s164, %s145, 128, 128, 8
        $region20: #{tpu_custom_call.1} parent=15 // pred_fallthru
          _
        // Predicated region
        $region21: #{tpu_custom_call.1} parent=15 // pred_check
          %p170 = pneg %p64
        $region22: #{tpu_custom_call.1} parent=15 // pred_check_branch
          %172 = sbr.rel (%p170) target = $region24
        $region23: #{tpu_custom_call.1} parent=15 // pred_region
          %s173 = sand.u32 %s18, 1
          %s174 = scalar_lea.sflag [#allocation6], %s173
          %s175 = sand.u32 %s54, 1
          %s176 = smul.addr %s175, 104
          %s177 = scalar_lea.vmem [#allocation5], %s176
          %s178 = smul.u32 13, %s18
          %s179 = ssub.s32 25, %s178
          %p180 = scmp.lt.s32.totalorder %s179, 13
          %s181 = scalar_select %p180, %s179, 13
          %s182 = smul.u32 8, %s181
          %s183 = ssub.s32 104, %s182
          %s184 = sshll.u32 %s183, 4
          %185 = vsyncadd %s174, %s184
          %p186 = scmp.ne.s32.totalorder 0, %s182
          %s187 = smul.addr %s178, 8
          %s188 = scalar_lea.hbm %s1, %s187
          %s189 = smul.u32 8, %s181
          %s190 = sshll.u32 %s188, 4
          %s191 = int_to_ptr.hbm [resolvable:$true] %s190
          %s192 = sshll.u32 %s177, 4
          %s193 = int_to_ptr.vmem [resolvable:$true] %s192
          %s194 = sshll.u32 %s189, 4
          %198 = dma.hbm_to_vmem [thread:$0]  (%p186), %s191, %s194, %s193, %s174, 128, 128, 8
        $region24: #{tpu_custom_call.1} parent=15 // pred_fallthru
          _
        // Predicated region
        $region25: #{tpu_custom_call.1} parent=15 // pred_check
          %p199 = pneg %p90
        $region26: #{tpu_custom_call.1} parent=15 // pred_check_branch
          %201 = sbr.rel (%p199) target = $region28
        $region27: #{tpu_custom_call.1} parent=15 // pred_region
          %s202 = sand.u32 %s18, 1
          %s203 = scalar_lea.sflag [#allocation6], %s202
          %s204 = sand.u32 %s80, 1
          %s205 = smul.addr %s204, 104
          %s206 = scalar_lea.vmem [#allocation7], %s205
          %s207 = smul.u32 13, %s18
          %s208 = ssub.s32 25, %s207
          %p209 = scmp.lt.s32.totalorder %s208, 13
          %s210 = scalar_select %p209, %s208, 13
          %s211 = smul.u32 8, %s210
          %s212 = ssub.s32 104, %s211
          %s213 = sshll.u32 %s212, 4
          %214 = vsyncadd %s203, %s213
          %p215 = scmp.ne.s32.totalorder 0, %s211
          %s216 = smul.addr %s207, 8
          %s217 = scalar_lea.hbm %s2, %s216
          %s218 = smul.u32 8, %s210
          %s219 = sshll.u32 %s217, 4
          %s220 = int_to_ptr.hbm [resolvable:$true] %s219
          %s221 = sshll.u32 %s206, 4
          %s222 = int_to_ptr.vmem [resolvable:$true] %s221
          %s223 = sshll.u32 %s218, 4
          %227 = dma.hbm_to_vmem [thread:$0]  (%p215), %s220, %s223, %s222, %s203, 128, 128, 8
        $region28: #{tpu_custom_call.1} parent=15 // pred_fallthru
          _
      $region16: #{tpu_custom_call.1} parent=5 // pred_fallthru
        _
      %p228 = scmp.le.s32.totalorder 1, %s18
      %p229 = scmp.lt.s32.totalorder %s18, 3
      %p230 = pnand %p228, %p229
      %p231 = pneg %p230
      // Predicated region
      $region29: #{tpu_custom_call.1} parent=5 // pred_check
        _
      $region30: #{tpu_custom_call.1} parent=5 // pred_check_branch
        %233 = sbr.rel (%p230) target = $region32
      $region31: #{tpu_custom_call.1} parent=5 // pred_region
        %s234 = ssub.s32 %s18, 1
        %s235 = sand.u32 %s31, 1
        %s236 = scalar_lea.sflag [#allocation3], %s235
        %s237 = sand.u32 %s31, 1
        %s238 = smul.addr %s237, 104
        %s239 = scalar_lea.vmem [#allocation2], %s238
        // Predicated region
        $region33: #{tpu_custom_call.1} parent=31 // pred_check
          %p240 = pneg %p44
        $region34: #{tpu_custom_call.1} parent=31 // pred_check_branch
          %242 = sbr.rel (%p240) target = $region36
        $region35: #{tpu_custom_call.1} parent=31 // pred_region
          %244 = dma.done %s236, 1664
        $region36: #{tpu_custom_call.1} parent=31 // pred_fallthru
          _
        %s245 = sand.u32 %s23, 1
        %s246 = scalar_lea.sflag [#allocation6], %s245
        %s247 = sand.u32 %s57, 1
        %s248 = smul.addr %s247, 104
        %s249 = scalar_lea.vmem [#allocation5], %s248
        // Predicated region
        $region37: #{tpu_custom_call.1} parent=31 // pred_check
          %p250 = pneg %p70
        $region38: #{tpu_custom_call.1} parent=31 // pred_check_branch
          %252 = sbr.rel (%p250) target = $region40
        $region39: #{tpu_custom_call.1} parent=31 // pred_region
          %254 = dma.done %s246, 1664
        $region40: #{tpu_custom_call.1} parent=31 // pred_fallthru
          _
        %s255 = sand.u32 %s23, 1
        %s256 = scalar_lea.sflag [#allocation6], %s255
        %s257 = sand.u32 %s83, 1
        %s258 = smul.addr %s257, 104
        %s259 = scalar_lea.vmem [#allocation7], %s258
        // Predicated region
        $region41: #{tpu_custom_call.1} parent=31 // pred_check
          %p260 = pneg %p96
        $region42: #{tpu_custom_call.1} parent=31 // pred_check_branch
          %262 = sbr.rel (%p260) target = $region44
        $region43: #{tpu_custom_call.1} parent=31 // pred_region
          %264 = dma.done %s256, 1664
        $region44: #{tpu_custom_call.1} parent=31 // pred_fallthru
          _
        %s265 = sand.u32 %s31, 1
        %s266 = scalar_lea.sflag [#allocation3], %s265
        %s267 = sand.u32 %s31, 1
        %s268 = smul.addr %s267, 104
        %s269 = scalar_lea.vmem [#allocation2], %s268
        %p270 = pneg %p44
        %p271 = pneg %p41
        %s272 = sand.u32 %s23, 1
        %s273 = scalar_lea.sflag [#allocation6], %s272
        %s274 = sand.u32 %s57, 1
        %s275 = smul.addr %s274, 104
        %s276 = scalar_lea.vmem [#allocation5], %s275
        %p277 = pneg %p70
        %p278 = pneg %p67
        %s279 = sand.u32 %s23, 1
        %s280 = scalar_lea.sflag [#allocation6], %s279
        %s281 = sand.u32 %s83, 1
        %s282 = smul.addr %s281, 104
        %s283 = scalar_lea.vmem [#allocation7], %s282
        %p284 = pneg %p96
        %p285 = pneg %p93
        %p286 = pneg %p122
        %p287 = pneg %p119
        %s288 = sand.u32 %s109, 1
        %s289 = scalar_lea.sflag [#allocation4], %s288
        %s290 = sand.u32 %s109, 1
        %s291 = smul.addr %s290, 8
        %s292 = scalar_lea.vmem [#allocation8], %s291
        %s293 = smul.u32 13, %s23
        %s294 = ssub.s32 25, %s293
        %p295 = scmp.lt.s32.totalorder %s294, 13
        %s296 = scalar_select %p295, %s294, 13
        %s297 = smul.u32 8, %s296
        %s298 = smul.u32 13, %s23
        %s299 = ssub.s32 25, %s298
        %p300 = scmp.lt.s32.totalorder %s299, 13
        %s301 = scalar_select %p300, %s299, 13
        %s302 = smul.u32 8, %s301
        %s303 = smul.u32 13, %s23
        %s304 = ssub.s32 25, %s303
        %p305 = scmp.lt.s32.totalorder %s304, 13
        %s306 = scalar_select %p305, %s304, 13
        %s307 = smul.u32 8, %s306
        %v308 = vld [vmem:[%s239] sm:$0xff]
        %v309 = vld [vmem:[%s239 + $0x8] sm:$0xff]
        %v310 = vld [vmem:[%s239 + $0x10] sm:$0xff]
        %v311 = vld [vmem:[%s239 + $0x18] sm:$0xff]
        %v312 = vld [vmem:[%s239 + $0x20] sm:$0xff]
        %v313 = vld [vmem:[%s239 + $0x28] sm:$0xff]
        %v314 = vld [vmem:[%s239 + $0x30] sm:$0xff]
        %v315 = vld [vmem:[%s239 + $0x38] sm:$0xff]
        %v316 = vld [vmem:[%s239 + $0x40] sm:$0xff]
        %v317 = vld [vmem:[%s239 + $0x48] sm:$0xff]
        %v318 = vld [vmem:[%s239 + $0x50] sm:$0xff]
        %v319 = vld [vmem:[%s239 + $0x58] sm:$0xff]
        %v320 = vld [vmem:[%s239 + $0x60] sm:$0xff]
        %v321 = vld [vmem:[%s249] sm:$0xff]
        %v322 = vld [vmem:[%s249 + $0x8] sm:$0xff]
        %v323 = vld [vmem:[%s249 + $0x10] sm:$0xff]
        %v324 = vld [vmem:[%s249 + $0x18] sm:$0xff]
        %v325 = vld [vmem:[%s249 + $0x20] sm:$0xff]
        %v326 = vld [vmem:[%s249 + $0x28] sm:$0xff]
        %v327 = vld [vmem:[%s249 + $0x30] sm:$0xff]
        %v328 = vld [vmem:[%s249 + $0x38] sm:$0xff]
        %v329 = vld [vmem:[%s249 + $0x40] sm:$0xff]
        %v330 = vld [vmem:[%s249 + $0x48] sm:$0xff]
        %v331 = vld [vmem:[%s249 + $0x50] sm:$0xff]
        %v332 = vld [vmem:[%s249 + $0x58] sm:$0xff]
        %v333 = vld [vmem:[%s249 + $0x60] sm:$0xff]
        %v334 = vld [vmem:[%s259] sm:$0xff]
        %v335 = vld [vmem:[%s259 + $0x8] sm:$0xff]
        %v336 = vld [vmem:[%s259 + $0x10] sm:$0xff]
        %v337 = vld [vmem:[%s259 + $0x18] sm:$0xff]
        %v338 = vld [vmem:[%s259 + $0x20] sm:$0xff]
        %v339 = vld [vmem:[%s259 + $0x28] sm:$0xff]
        %v340 = vld [vmem:[%s259 + $0x30] sm:$0xff]
        %v341 = vld [vmem:[%s259 + $0x38] sm:$0xff]
        %v342 = vld [vmem:[%s259 + $0x40] sm:$0xff]
        %v343 = vld [vmem:[%s259 + $0x48] sm:$0xff]
        %v344 = vld [vmem:[%s259 + $0x50] sm:$0xff]
        %v345 = vld [vmem:[%s259 + $0x58] sm:$0xff]
        %v346 = vld [vmem:[%s259 + $0x60] sm:$0xff]
        %v347 = vmul.f32 %v308, %v321
        %v348 = vmul.f32 %v309, %v322
        %v349 = vmul.f32 %v310, %v323
        %v350 = vmul.f32 %v311, %v324
        %v351 = vmul.f32 %v312, %v325
        %v352 = vmul.f32 %v313, %v326
        %v353 = vmul.f32 %v314, %v327
        %v354 = vmul.f32 %v315, %v328
        %v355 = vmul.f32 %v316, %v329
        %v356 = vmul.f32 %v317, %v330
        %v357 = vmul.f32 %v318, %v331
        %v358 = vmul.f32 %v319, %v332
        %v359 = vmul.f32 %v320, %v333
        %360 = vmatpush.msra.mxu0 1.0
        %361 = vmatpush.msra.mxu0 1.0
        %362 = vmatpush.msra.mxu0 1.0
        %363 = vmatpush.msra.mxu0 1.0
        %364 = vmatpush.msra.mxu0 1.0
        %365 = vmatpush.msra.mxu0 1.0
        %366 = vmatpush.msra.mxu0 1.0
        %367 = vmatpush.msra.mxu0 1.0
        %368 = vmatpush.msra.mxu0 1.0
        %369 = vmatpush.msra.mxu0 1.0
        %370 = vmatpush.msra.mxu0 1.0
        %371 = vmatpush.msra.mxu0 1.0
        %372 = vmatpush.msra.mxu0 1.0
        %373 = vmatpush.msra.mxu0 1.0
        %374 = vmatpush.msra.mxu0 1.0
        %375 = vmatpush.msra.mxu0 1.0
        %v376 = vand.u32 %v347, 4294901760
        %v377 = vsub.f32 %v347, %v376
        %v378 = vand.u32 %v377, 4294901760
        %v379 = vsub.f32 %v377, %v378
        %v380 = vand.u32 %v379, 4294901760
        %381 = vmatmul.f32.gmra.mxu0 %v380
        %v382 = vpop.f32.mrf.mxu0
        %v383 = vadd.f32 0.0, %v382
        %v384 = vand.u32 %v348, 4294901760
        %v385 = vsub.f32 %v348, %v384
        %v386 = vand.u32 %v385, 4294901760
        %v387 = vsub.f32 %v385, %v386
        %v388 = vand.u32 %v387, 4294901760
        %389 = vmatmul.f32.gmra.mxu0 %v388
        %v390 = vpop.f32.mrf.mxu0
        %v391 = vadd.f32 0.0, %v390
        %v392 = vand.u32 %v349, 4294901760
        %v393 = vsub.f32 %v349, %v392
        %v394 = vand.u32 %v393, 4294901760
        %v395 = vsub.f32 %v393, %v394
        %v396 = vand.u32 %v395, 4294901760
        %397 = vmatmul.f32.gmra.mxu0 %v396
        %v398 = vpop.f32.mrf.mxu0
        %v399 = vadd.f32 0.0, %v398
        %v400 = vand.u32 %v350, 4294901760
        %v401 = vsub.f32 %v350, %v400
        %v402 = vand.u32 %v401, 4294901760
        %v403 = vsub.f32 %v401, %v402
        %v404 = vand.u32 %v403, 4294901760
        %405 = vmatmul.f32.gmra.mxu0 %v404
        %v406 = vpop.f32.mrf.mxu0
        %v407 = vadd.f32 0.0, %v406
        %v408 = vand.u32 %v351, 4294901760
        %v409 = vsub.f32 %v351, %v408
        %v410 = vand.u32 %v409, 4294901760
        %v411 = vsub.f32 %v409, %v410
        %v412 = vand.u32 %v411, 4294901760
        %413 = vmatmul.f32.gmra.mxu0 %v412
        %v414 = vpop.f32.mrf.mxu0
        %v415 = vadd.f32 0.0, %v414
        %v416 = vand.u32 %v352, 4294901760
        %v417 = vsub.f32 %v352, %v416
        %v418 = vand.u32 %v417, 4294901760
        %v419 = vsub.f32 %v417, %v418
        %v420 = vand.u32 %v419, 4294901760
        %421 = vmatmul.f32.gmra.mxu0 %v420
        %v422 = vpop.f32.mrf.mxu0
        %v423 = vadd.f32 0.0, %v422
        %v424 = vand.u32 %v353, 4294901760
        %v425 = vsub.f32 %v353, %v424
        %v426 = vand.u32 %v425, 4294901760
        %v427 = vsub.f32 %v425, %v426
        %v428 = vand.u32 %v427, 4294901760
        %429 = vmatmul.f32.gmra.mxu0 %v428
        %v430 = vpop.f32.mrf.mxu0
        %v431 = vadd.f32 0.0, %v430
        %v432 = vand.u32 %v354, 4294901760
        %v433 = vsub.f32 %v354, %v432
        %v434 = vand.u32 %v433, 4294901760
        %v435 = vsub.f32 %v433, %v434
        %v436 = vand.u32 %v435, 4294901760
        %437 = vmatmul.f32.gmra.mxu0 %v436
        %v438 = vpop.f32.mrf.mxu0
        %v439 = vadd.f32 0.0, %v438
        %v440 = vand.u32 %v355, 4294901760
        %v441 = vsub.f32 %v355, %v440
        %v442 = vand.u32 %v441, 4294901760
        %v443 = vsub.f32 %v441, %v442
        %v444 = vand.u32 %v443, 4294901760
        %445 = vmatmul.f32.gmra.mxu0 %v444
        %v446 = vpop.f32.mrf.mxu0
        %v447 = vadd.f32 0.0, %v446
        %v448 = vand.u32 %v356, 4294901760
        %v449 = vsub.f32 %v356, %v448
        %v450 = vand.u32 %v449, 4294901760
        %v451 = vsub.f32 %v449, %v450
        %v452 = vand.u32 %v451, 4294901760
        %453 = vmatmul.f32.gmra.mxu0 %v452
        %v454 = vpop.f32.mrf.mxu0
        %v455 = vadd.f32 0.0, %v454
        %v456 = vand.u32 %v357, 4294901760
        %v457 = vsub.f32 %v357, %v456
        %v458 = vand.u32 %v457, 4294901760
        %v459 = vsub.f32 %v457, %v458
        %v460 = vand.u32 %v459, 4294901760
        %461 = vmatmul.f32.gmra.mxu0 %v460
        %v462 = vpop.f32.mrf.mxu0
        %v463 = vadd.f32 0.0, %v462
        %v464 = vand.u32 %v358, 4294901760
        %v465 = vsub.f32 %v358, %v464
        %v466 = vand.u32 %v465, 4294901760
        %v467 = vsub.f32 %v465, %v466
        %v468 = vand.u32 %v467, 4294901760
        %469 = vmatmul.f32.gmra.mxu0 %v468
        %v470 = vpop.f32.mrf.mxu0
        %v471 = vadd.f32 0.0, %v470
        %v472 = vand.u32 %v359, 4294901760
        %v473 = vsub.f32 %v359, %v472
        %v474 = vand.u32 %v473, 4294901760
        %v475 = vsub.f32 %v473, %v474
        %v476 = vand.u32 %v475, 4294901760
        %477 = vmatmul.f32.gmra.mxu0 %v476
        %v478 = vpop.f32.mrf.mxu0
        %v479 = vadd.f32 0.0, %v478
        %480 = vdwg.mxu0
        %481 = vmatpush.msra.mxu0 0.0
        %482 = vmatpush.msra.mxu0 0.0
        %483 = vmatpush.msra.mxu0 0.0
        %484 = vmatpush.msra.mxu0 0.0
        %485 = vmatpush.msra.mxu0 0.0
        %486 = vmatpush.msra.mxu0 0.0
        %487 = vmatpush.msra.mxu0 0.0
        %488 = vmatpush.msra.mxu0 0.0
        %489 = vmatpush.msra.mxu0 0.0
        %490 = vmatpush.msra.mxu0 0.0
        %491 = vmatpush.msra.mxu0 0.0
        %492 = vmatpush.msra.mxu0 0.0
        %493 = vmatpush.msra.mxu0 0.0
        %494 = vmatpush.msra.mxu0 0.0
        %495 = vmatpush.msra.mxu0 0.0
        %496 = vmatpush.msra.mxu0 0.0
        %v497 = vand.u32 %v347, 4294901760
        %498 = vmatmul.f32.gmra.mxu0 %v497
        %v499 = vpop.f32.mrf.mxu0
        %v500 = vadd.f32 %v383, %v499
        %v501 = vand.u32 %v348, 4294901760
        %502 = vmatmul.f32.gmra.mxu0 %v501
        %v503 = vpop.f32.mrf.mxu0
        %v504 = vadd.f32 %v391, %v503
        %v505 = vand.u32 %v349, 4294901760
        %506 = vmatmul.f32.gmra.mxu0 %v505
        %v507 = vpop.f32.mrf.mxu0
        %v508 = vadd.f32 %v399, %v507
        %v509 = vand.u32 %v350, 4294901760
        %510 = vmatmul.f32.gmra.mxu0 %v509
        %v511 = vpop.f32.mrf.mxu0
        %v512 = vadd.f32 %v407, %v511
        %v513 = vand.u32 %v351, 4294901760
        %514 = vmatmul.f32.gmra.mxu0 %v513
        %v515 = vpop.f32.mrf.mxu0
        %v516 = vadd.f32 %v415, %v515
        %v517 = vand.u32 %v352, 4294901760
        %518 = vmatmul.f32.gmra.mxu0 %v517
        %v519 = vpop.f32.mrf.mxu0
        %v520 = vadd.f32 %v423, %v519
        %v521 = vand.u32 %v353, 4294901760
        %522 = vmatmul.f32.gmra.mxu0 %v521
        %v523 = vpop.f32.mrf.mxu0
        %v524 = vadd.f32 %v431, %v523
        %v525 = vand.u32 %v354, 4294901760
        %526 = vmatmul.f32.gmra.mxu0 %v525
        %v527 = vpop.f32.mrf.mxu0
        %v528 = vadd.f32 %v439, %v527
        %v529 = vand.u32 %v355, 4294901760
        %530 = vmatmul.f32.gmra.mxu0 %v529
        %v531 = vpop.f32.mrf.mxu0
        %v532 = vadd.f32 %v447, %v531
        %v533 = vand.u32 %v356, 4294901760
        %534 = vmatmul.f32.gmra.mxu0 %v533
        %v535 = vpop.f32.mrf.mxu0
        %v536 = vadd.f32 %v455, %v535
        %v537 = vand.u32 %v357, 4294901760
        %538 = vmatmul.f32.gmra.mxu0 %v537
        %v539 = vpop.f32.mrf.mxu0
        %v540 = vadd.f32 %v463, %v539
        %v541 = vand.u32 %v358, 4294901760
        %542 = vmatmul.f32.gmra.mxu0 %v541
        %v543 = vpop.f32.mrf.mxu0
        %v544 = vadd.f32 %v471, %v543
        %v545 = vand.u32 %v359, 4294901760
        %546 = vmatmul.f32.gmra.mxu0 %v545
        %v547 = vpop.f32.mrf.mxu0
        %v548 = vadd.f32 %v479, %v547
        %549 = vdwg.mxu0
        %550 = vmatpush.msra.mxu0 0.0
        %551 = vmatpush.msra.mxu0 0.0
        %552 = vmatpush.msra.mxu0 0.0
        %553 = vmatpush.msra.mxu0 0.0
        %554 = vmatpush.msra.mxu0 0.0
        %555 = vmatpush.msra.mxu0 0.0
        %556 = vmatpush.msra.mxu0 0.0
        %557 = vmatpush.msra.mxu0 0.0
        %558 = vmatpush.msra.mxu0 0.0
        %559 = vmatpush.msra.mxu0 0.0
        %560 = vmatpush.msra.mxu0 0.0
        %561 = vmatpush.msra.mxu0 0.0
        %562 = vmatpush.msra.mxu0 0.0
        %563 = vmatpush.msra.mxu0 0.0
        %564 = vmatpush.msra.mxu0 0.0
        %565 = vmatpush.msra.mxu0 0.0
        %v566 = vand.u32 %v347, 4294901760
        %v567 = vsub.f32 %v347, %v566
        %568 = vmatmul.f32.gmra.mxu0 %v567
        %v569 = vpop.f32.mrf.mxu0
        %v570 = vadd.f32 %v500, %v569
        %v571 = vand.u32 %v348, 4294901760
        %v572 = vsub.f32 %v348, %v571
        %573 = vmatmul.f32.gmra.mxu0 %v572
        %v574 = vpop.f32.mrf.mxu0
        %v575 = vadd.f32 %v504, %v574
        %v576 = vand.u32 %v349, 4294901760
        %v577 = vsub.f32 %v349, %v576
        %578 = vmatmul.f32.gmra.mxu0 %v577
        %v579 = vpop.f32.mrf.mxu0
        %v580 = vadd.f32 %v508, %v579
        %v581 = vand.u32 %v350, 4294901760
        %v582 = vsub.f32 %v350, %v581
        %583 = vmatmul.f32.gmra.mxu0 %v582
        %v584 = vpop.f32.mrf.mxu0
        %v585 = vadd.f32 %v512, %v584
        %v586 = vand.u32 %v351, 4294901760
        %v587 = vsub.f32 %v351, %v586
        %588 = vmatmul.f32.gmra.mxu0 %v587
        %v589 = vpop.f32.mrf.mxu0
        %v590 = vadd.f32 %v516, %v589
        %v591 = vand.u32 %v352, 4294901760
        %v592 = vsub.f32 %v352, %v591
        %593 = vmatmul.f32.gmra.mxu0 %v592
        %v594 = vpop.f32.mrf.mxu0
        %v595 = vadd.f32 %v520, %v594
        %v596 = vand.u32 %v353, 4294901760
        %v597 = vsub.f32 %v353, %v596
        %598 = vmatmul.f32.gmra.mxu0 %v597
        %v599 = vpop.f32.mrf.mxu0
        %v600 = vadd.f32 %v524, %v599
        %v601 = vand.u32 %v354, 4294901760
        %v602 = vsub.f32 %v354, %v601
        %603 = vmatmul.f32.gmra.mxu0 %v602
        %v604 = vpop.f32.mrf.mxu0
        %v605 = vadd.f32 %v528, %v604
        %v606 = vand.u32 %v355, 4294901760
        %v607 = vsub.f32 %v355, %v606
        %608 = vmatmul.f32.gmra.mxu0 %v607
        %v609 = vpop.f32.mrf.mxu0
        %v610 = vadd.f32 %v532, %v609
        %v611 = vand.u32 %v356, 4294901760
        %v612 = vsub.f32 %v356, %v611
        %613 = vmatmul.f32.gmra.mxu0 %v612
        %v614 = vpop.f32.mrf.mxu0
        %v615 = vadd.f32 %v536, %v614
        %v616 = vand.u32 %v357, 4294901760
        %v617 = vsub.f32 %v357, %v616
        %618 = vmatmul.f32.gmra.mxu0 %v617
        %v619 = vpop.f32.mrf.mxu0
        %v620 = vadd.f32 %v540, %v619
        %v621 = vand.u32 %v358, 4294901760
        %v622 = vsub.f32 %v358, %v621
        %623 = vmatmul.f32.gmra.mxu0 %v622
        %v624 = vpop.f32.mrf.mxu0
        %v625 = vadd.f32 %v544, %v624
        %v626 = vand.u32 %v359, 4294901760
        %v627 = vsub.f32 %v359, %v626
        %628 = vmatmul.f32.gmra.mxu0 %v627
        %v629 = vpop.f32.mrf.mxu0
        %v630 = vadd.f32 %v548, %v629
        %631 = vdwg.mxu0
        %632 = vmatpush.msra.mxu0 1.0
        %633 = vmatpush.msra.mxu0 1.0
        %634 = vmatpush.msra.mxu0 1.0
        %635 = vmatpush.msra.mxu0 1.0
        %636 = vmatpush.msra.mxu0 1.0
        %637 = vmatpush.msra.mxu0 1.0
        %638 = vmatpush.msra.mxu0 1.0
        %639 = vmatpush.msra.mxu0 1.0
        %640 = vmatpush.msra.mxu0 1.0
        %641 = vmatpush.msra.mxu0 1.0
        %642 = vmatpush.msra.mxu0 1.0
        %643 = vmatpush.msra.mxu0 1.0
        %644 = vmatpush.msra.mxu0 1.0
        %645 = vmatpush.msra.mxu0 1.0
        %646 = vmatpush.msra.mxu0 1.0
        %647 = vmatpush.msra.mxu0 1.0
        %v648 = vand.u32 %v347, 4294901760
        %v649 = vsub.f32 %v347, %v648
        %v650 = vand.u32 %v649, 4294901760
        %651 = vmatmul.f32.gmra.mxu0 %v650
        %v652 = vpop.f32.mrf.mxu0
        %v653 = vadd.f32 %v570, %v652
        %v654 = vand.u32 %v348, 4294901760
        %v655 = vsub.f32 %v348, %v654
        %v656 = vand.u32 %v655, 4294901760
        %657 = vmatmul.f32.gmra.mxu0 %v656
        %v658 = vpop.f32.mrf.mxu0
        %v659 = vadd.f32 %v575, %v658
        %v660 = vand.u32 %v349, 4294901760
        %v661 = vsub.f32 %v349, %v660
        %v662 = vand.u32 %v661, 4294901760
        %663 = vmatmul.f32.gmra.mxu0 %v662
        %v664 = vpop.f32.mrf.mxu0
        %v665 = vadd.f32 %v580, %v664
        %v666 = vand.u32 %v350, 4294901760
        %v667 = vsub.f32 %v350, %v666
        %v668 = vand.u32 %v667, 4294901760
        %669 = vmatmul.f32.gmra.mxu0 %v668
        %v670 = vpop.f32.mrf.mxu0
        %v671 = vadd.f32 %v585, %v670
        %v672 = vand.u32 %v351, 4294901760
        %v673 = vsub.f32 %v351, %v672
        %v674 = vand.u32 %v673, 4294901760
        %675 = vmatmul.f32.gmra.mxu0 %v674
        %v676 = vpop.f32.mrf.mxu0
        %v677 = vadd.f32 %v590, %v676
        %v678 = vand.u32 %v352, 4294901760
        %v679 = vsub.f32 %v352, %v678
        %v680 = vand.u32 %v679, 4294901760
        %681 = vmatmul.f32.gmra.mxu0 %v680
        %v682 = vpop.f32.mrf.mxu0
        %v683 = vadd.f32 %v595, %v682
        %v684 = vand.u32 %v353, 4294901760
        %v685 = vsub.f32 %v353, %v684
        %v686 = vand.u32 %v685, 4294901760
        %687 = vmatmul.f32.gmra.mxu0 %v686
        %v688 = vpop.f32.mrf.mxu0
        %v689 = vadd.f32 %v600, %v688
        %v690 = vand.u32 %v354, 4294901760
        %v691 = vsub.f32 %v354, %v690
        %v692 = vand.u32 %v691, 4294901760
        %693 = vmatmul.f32.gmra.mxu0 %v692
        %v694 = vpop.f32.mrf.mxu0
        %v695 = vadd.f32 %v605, %v694
        %v696 = vand.u32 %v355, 4294901760
        %v697 = vsub.f32 %v355, %v696
        %v698 = vand.u32 %v697, 4294901760
        %699 = vmatmul.f32.gmra.mxu0 %v698
        %v700 = vpop.f32.mrf.mxu0
        %v701 = vadd.f32 %v610, %v700
        %v702 = vand.u32 %v356, 4294901760
        %v703 = vsub.f32 %v356, %v702
        %v704 = vand.u32 %v703, 4294901760
        %705 = vmatmul.f32.gmra.mxu0 %v704
        %v706 = vpop.f32.mrf.mxu0
        %v707 = vadd.f32 %v615, %v706
        %v708 = vand.u32 %v357, 4294901760
        %v709 = vsub.f32 %v357, %v708
        %v710 = vand.u32 %v709, 4294901760
        %711 = vmatmul.f32.gmra.mxu0 %v710
        %v712 = vpop.f32.mrf.mxu0
        %v713 = vadd.f32 %v620, %v712
        %v714 = vand.u32 %v358, 4294901760
        %v715 = vsub.f32 %v358, %v714
        %v716 = vand.u32 %v715, 4294901760
        %717 = vmatmul.f32.gmra.mxu0 %v716
        %v718 = vpop.f32.mrf.mxu0
        %v719 = vadd.f32 %v625, %v718
        %v720 = vand.u32 %v359, 4294901760
        %v721 = vsub.f32 %v359, %v720
        %v722 = vand.u32 %v721, 4294901760
        %723 = vmatmul.f32.gmra.mxu0 %v722
        %v724 = vpop.f32.mrf.mxu0
        %v725 = vadd.f32 %v630, %v724
        %726 = vdwg.mxu0
        %727 = vmatpush.msra.mxu0 0.0
        %728 = vmatpush.msra.mxu0 0.0
        %729 = vmatpush.msra.mxu0 0.0
        %730 = vmatpush.msra.mxu0 0.0
        %731 = vmatpush.msra.mxu0 0.0
        %732 = vmatpush.msra.mxu0 0.0
        %733 = vmatpush.msra.mxu0 0.0
        %734 = vmatpush.msra.mxu0 0.0
        %735 = vmatpush.msra.mxu0 0.0
        %736 = vmatpush.msra.mxu0 0.0
        %737 = vmatpush.msra.mxu0 0.0
        %738 = vmatpush.msra.mxu0 0.0
        %739 = vmatpush.msra.mxu0 0.0
        %740 = vmatpush.msra.mxu0 0.0
        %741 = vmatpush.msra.mxu0 0.0
        %742 = vmatpush.msra.mxu0 0.0
        %v743 = vand.u32 %v347, 4294901760
        %744 = vmatmul.f32.gmra.mxu0 %v743
        %v745 = vpop.f32.mrf.mxu0
        %v746 = vadd.f32 %v653, %v745
        %v747 = vand.u32 %v348, 4294901760
        %748 = vmatmul.f32.gmra.mxu0 %v747
        %v749 = vpop.f32.mrf.mxu0
        %v750 = vadd.f32 %v659, %v749
        %v751 = vand.u32 %v349, 4294901760
        %752 = vmatmul.f32.gmra.mxu0 %v751
        %v753 = vpop.f32.mrf.mxu0
        %v754 = vadd.f32 %v665, %v753
        %v755 = vand.u32 %v350, 4294901760
        %756 = vmatmul.f32.gmra.mxu0 %v755
        %v757 = vpop.f32.mrf.mxu0
        %v758 = vadd.f32 %v671, %v757
        %v759 = vand.u32 %v351, 4294901760
        %760 = vmatmul.f32.gmra.mxu0 %v759
        %v761 = vpop.f32.mrf.mxu0
        %v762 = vadd.f32 %v677, %v761
        %v763 = vand.u32 %v352, 4294901760
        %764 = vmatmul.f32.gmra.mxu0 %v763
        %v765 = vpop.f32.mrf.mxu0
        %v766 = vadd.f32 %v683, %v765
        %v767 = vand.u32 %v353, 4294901760
        %768 = vmatmul.f32.gmra.mxu0 %v767
        %v769 = vpop.f32.mrf.mxu0
        %v770 = vadd.f32 %v689, %v769
        %v771 = vand.u32 %v354, 4294901760
        %772 = vmatmul.f32.gmra.mxu0 %v771
        %v773 = vpop.f32.mrf.mxu0
        %v774 = vadd.f32 %v695, %v773
        %v775 = vand.u32 %v355, 4294901760
        %776 = vmatmul.f32.gmra.mxu0 %v775
        %v777 = vpop.f32.mrf.mxu0
        %v778 = vadd.f32 %v701, %v777
        %v779 = vand.u32 %v356, 4294901760
        %780 = vmatmul.f32.gmra.mxu0 %v779
        %v781 = vpop.f32.mrf.mxu0
        %v782 = vadd.f32 %v707, %v781
        %v783 = vand.u32 %v357, 4294901760
        %784 = vmatmul.f32.gmra.mxu0 %v783
        %v785 = vpop.f32.mrf.mxu0
        %v786 = vadd.f32 %v713, %v785
        %v787 = vand.u32 %v358, 4294901760
        %788 = vmatmul.f32.gmra.mxu0 %v787
        %v789 = vpop.f32.mrf.mxu0
        %v790 = vadd.f32 %v719, %v789
        %v791 = vand.u32 %v359, 4294901760
        %792 = vmatmul.f32.gmra.mxu0 %v791
        %v793 = vpop.f32.mrf.mxu0
        %v794 = vadd.f32 %v725, %v793
        %795 = vdwg.mxu0
        %796 = vmatpush.msra.mxu0 1.0
        %797 = vmatpush.msra.mxu0 1.0
        %798 = vmatpush.msra.mxu0 1.0
        %799 = vmatpush.msra.mxu0 1.0
        %800 = vmatpush.msra.mxu0 1.0
        %801 = vmatpush.msra.mxu0 1.0
        %802 = vmatpush.msra.mxu0 1.0
        %803 = vmatpush.msra.mxu0 1.0
        %804 = vmatpush.msra.mxu0 1.0
        %805 = vmatpush.msra.mxu0 1.0
        %806 = vmatpush.msra.mxu0 1.0
        %807 = vmatpush.msra.mxu0 1.0
        %808 = vmatpush.msra.mxu0 1.0
        %809 = vmatpush.msra.mxu0 1.0
        %810 = vmatpush.msra.mxu0 1.0
        %811 = vmatpush.msra.mxu0 1.0
        %v812 = vand.u32 %v347, 4294901760
        %813 = vmatmul.f32.gmra.mxu0 %v812
        %v814 = vpop.f32.mrf.mxu0
        %v815 = vadd.f32 %v746, %v814
        %v816 = vand.u32 %v348, 4294901760
        %817 = vmatmul.f32.gmra.mxu0 %v816
        %v818 = vpop.f32.mrf.mxu0
        %v819 = vadd.f32 %v750, %v818
        %v820 = vand.u32 %v349, 4294901760
        %821 = vmatmul.f32.gmra.mxu0 %v820
        %v822 = vpop.f32.mrf.mxu0
        %v823 = vadd.f32 %v754, %v822
        %v824 = vand.u32 %v350, 4294901760
        %825 = vmatmul.f32.gmra.mxu0 %v824
        %v826 = vpop.f32.mrf.mxu0
        %v827 = vadd.f32 %v758, %v826
        %v828 = vand.u32 %v351, 4294901760
        %829 = vmatmul.f32.gmra.mxu0 %v828
        %v830 = vpop.f32.mrf.mxu0
        %v831 = vadd.f32 %v762, %v830
        %v832 = vand.u32 %v352, 4294901760
        %833 = vmatmul.f32.gmra.mxu0 %v832
        %v834 = vpop.f32.mrf.mxu0
        %v835 = vadd.f32 %v766, %v834
        %v836 = vand.u32 %v353, 4294901760
        %837 = vmatmul.f32.gmra.mxu0 %v836
        %v838 = vpop.f32.mrf.mxu0
        %v839 = vadd.f32 %v770, %v838
        %v840 = vand.u32 %v354, 4294901760
        %841 = vmatmul.f32.gmra.mxu0 %v840
        %v842 = vpop.f32.mrf.mxu0
        %v843 = vadd.f32 %v774, %v842
        %v844 = vand.u32 %v355, 4294901760
        %845 = vmatmul.f32.gmra.mxu0 %v844
        %v846 = vpop.f32.mrf.mxu0
        %v847 = vadd.f32 %v778, %v846
        %v848 = vand.u32 %v356, 4294901760
        %849 = vmatmul.f32.gmra.mxu0 %v848
        %v850 = vpop.f32.mrf.mxu0
        %v851 = vadd.f32 %v782, %v850
        %v852 = vand.u32 %v357, 4294901760
        %853 = vmatmul.f32.gmra.mxu0 %v852
        %v854 = vpop.f32.mrf.mxu0
        %v855 = vadd.f32 %v786, %v854
        %v856 = vand.u32 %v358, 4294901760
        %857 = vmatmul.f32.gmra.mxu0 %v856
        %v858 = vpop.f32.mrf.mxu0
        %v859 = vadd.f32 %v790, %v858
        %v860 = vand.u32 %v359, 4294901760
        %861 = vmatmul.f32.gmra.mxu0 %v860
        %v862 = vpop.f32.mrf.mxu0
        %v863 = vadd.f32 %v794, %v862
        %864 = vdwg.mxu0
        %v865 = vmul.f32 %v308, %v334
        %v866 = vmul.f32 %v309, %v335
        %v867 = vmul.f32 %v310, %v336
        %v868 = vmul.f32 %v311, %v337
        %v869 = vmul.f32 %v312, %v338
        %v870 = vmul.f32 %v313, %v339
        %v871 = vmul.f32 %v314, %v340
        %v872 = vmul.f32 %v315, %v341
        %v873 = vmul.f32 %v316, %v342
        %v874 = vmul.f32 %v317, %v343
        %v875 = vmul.f32 %v318, %v344
        %v876 = vmul.f32 %v319, %v345
        %v877 = vmul.f32 %v320, %v346
        %878 = vmatpush.msra.mxu0 1.0
        %879 = vmatpush.msra.mxu0 1.0
        %880 = vmatpush.msra.mxu0 1.0
        %881 = vmatpush.msra.mxu0 1.0
        %882 = vmatpush.msra.mxu0 1.0
        %883 = vmatpush.msra.mxu0 1.0
        %884 = vmatpush.msra.mxu0 1.0
        %885 = vmatpush.msra.mxu0 1.0
        %886 = vmatpush.msra.mxu0 1.0
        %887 = vmatpush.msra.mxu0 1.0
        %888 = vmatpush.msra.mxu0 1.0
        %889 = vmatpush.msra.mxu0 1.0
        %890 = vmatpush.msra.mxu0 1.0
        %891 = vmatpush.msra.mxu0 1.0
        %892 = vmatpush.msra.mxu0 1.0
        %893 = vmatpush.msra.mxu0 1.0
        %v894 = vand.u32 %v865, 4294901760
        %v895 = vsub.f32 %v865, %v894
        %v896 = vand.u32 %v895, 4294901760
        %v897 = vsub.f32 %v895, %v896
        %v898 = vand.u32 %v897, 4294901760
        %899 = vmatmul.f32.gmra.mxu0 %v898
        %v900 = vpop.f32.mrf.mxu0
        %v901 = vadd.f32 0.0, %v900
        %v902 = vand.u32 %v866, 4294901760
        %v903 = vsub.f32 %v866, %v902
        %v904 = vand.u32 %v903, 4294901760
        %v905 = vsub.f32 %v903, %v904
        %v906 = vand.u32 %v905, 4294901760
        %907 = vmatmul.f32.gmra.mxu0 %v906
        %v908 = vpop.f32.mrf.mxu0
        %v909 = vadd.f32 0.0, %v908
        %v910 = vand.u32 %v867, 4294901760
        %v911 = vsub.f32 %v867, %v910
        %v912 = vand.u32 %v911, 4294901760
        %v913 = vsub.f32 %v911, %v912
        %v914 = vand.u32 %v913, 4294901760
        %915 = vmatmul.f32.gmra.mxu0 %v914
        %v916 = vpop.f32.mrf.mxu0
        %v917 = vadd.f32 0.0, %v916
        %v918 = vand.u32 %v868, 4294901760
        %v919 = vsub.f32 %v868, %v918
        %v920 = vand.u32 %v919, 4294901760
        %v921 = vsub.f32 %v919, %v920
        %v922 = vand.u32 %v921, 4294901760
        %923 = vmatmul.f32.gmra.mxu0 %v922
        %v924 = vpop.f32.mrf.mxu0
        %v925 = vadd.f32 0.0, %v924
        %v926 = vand.u32 %v869, 4294901760
        %v927 = vsub.f32 %v869, %v926
        %v928 = vand.u32 %v927, 4294901760
        %v929 = vsub.f32 %v927, %v928
        %v930 = vand.u32 %v929, 4294901760
        %931 = vmatmul.f32.gmra.mxu0 %v930
        %v932 = vpop.f32.mrf.mxu0
        %v933 = vadd.f32 0.0, %v932
        %v934 = vand.u32 %v870, 4294901760
        %v935 = vsub.f32 %v870, %v934
        %v936 = vand.u32 %v935, 4294901760
        %v937 = vsub.f32 %v935, %v936
        %v938 = vand.u32 %v937, 4294901760
        %939 = vmatmul.f32.gmra.mxu0 %v938
        %v940 = vpop.f32.mrf.mxu0
        %v941 = vadd.f32 0.0, %v940
        %v942 = vand.u32 %v871, 4294901760
        %v943 = vsub.f32 %v871, %v942
        %v944 = vand.u32 %v943, 4294901760
        %v945 = vsub.f32 %v943, %v944
        %v946 = vand.u32 %v945, 4294901760
        %947 = vmatmul.f32.gmra.mxu0 %v946
        %v948 = vpop.f32.mrf.mxu0
        %v949 = vadd.f32 0.0, %v948
        %v950 = vand.u32 %v872, 4294901760
        %v951 = vsub.f32 %v872, %v950
        %v952 = vand.u32 %v951, 4294901760
        %v953 = vsub.f32 %v951, %v952
        %v954 = vand.u32 %v953, 4294901760
        %955 = vmatmul.f32.gmra.mxu0 %v954
        %v956 = vpop.f32.mrf.mxu0
        %v957 = vadd.f32 0.0, %v956
        %v958 = vand.u32 %v873, 4294901760
        %v959 = vsub.f32 %v873, %v958
        %v960 = vand.u32 %v959, 4294901760
        %v961 = vsub.f32 %v959, %v960
        %v962 = vand.u32 %v961, 4294901760
        %963 = vmatmul.f32.gmra.mxu0 %v962
        %v964 = vpop.f32.mrf.mxu0
        %v965 = vadd.f32 0.0, %v964
        %v966 = vand.u32 %v874, 4294901760
        %v967 = vsub.f32 %v874, %v966
        %v968 = vand.u32 %v967, 4294901760
        %v969 = vsub.f32 %v967, %v968
        %v970 = vand.u32 %v969, 4294901760
        %971 = vmatmul.f32.gmra.mxu0 %v970
        %v972 = vpop.f32.mrf.mxu0
        %v973 = vadd.f32 0.0, %v972
        %v974 = vand.u32 %v875, 4294901760
        %v975 = vsub.f32 %v875, %v974
        %v976 = vand.u32 %v975, 4294901760
        %v977 = vsub.f32 %v975, %v976
        %v978 = vand.u32 %v977, 4294901760
        %979 = vmatmul.f32.gmra.mxu0 %v978
        %v980 = vpop.f32.mrf.mxu0
        %v981 = vadd.f32 0.0, %v980
        %v982 = vand.u32 %v876, 4294901760
        %v983 = vsub.f32 %v876, %v982
        %v984 = vand.u32 %v983, 4294901760
        %v985 = vsub.f32 %v983, %v984
        %v986 = vand.u32 %v985, 4294901760
        %987 = vmatmul.f32.gmra.mxu0 %v986
        %v988 = vpop.f32.mrf.mxu0
        %v989 = vadd.f32 0.0, %v988
        %v990 = vand.u32 %v877, 4294901760
        %v991 = vsub.f32 %v877, %v990
        %v992 = vand.u32 %v991, 4294901760
        %v993 = vsub.f32 %v991, %v992
        %v994 = vand.u32 %v993, 4294901760
        %995 = vmatmul.f32.gmra.mxu0 %v994
        %v996 = vpop.f32.mrf.mxu0
        %v997 = vadd.f32 0.0, %v996
        %998 = vdwg.mxu0
        %999 = vmatpush.msra.mxu0 0.0
        %1000 = vmatpush.msra.mxu0 0.0
        %1001 = vmatpush.msra.mxu0 0.0
        %1002 = vmatpush.msra.mxu0 0.0
        %1003 = vmatpush.msra.mxu0 0.0
        %1004 = vmatpush.msra.mxu0 0.0
        %1005 = vmatpush.msra.mxu0 0.0
        %1006 = vmatpush.msra.mxu0 0.0
        %1007 = vmatpush.msra.mxu0 0.0
        %1008 = vmatpush.msra.mxu0 0.0
        %1009 = vmatpush.msra.mxu0 0.0
        %1010 = vmatpush.msra.mxu0 0.0
        %1011 = vmatpush.msra.mxu0 0.0
        %1012 = vmatpush.msra.mxu0 0.0
        %1013 = vmatpush.msra.mxu0 0.0
        %1014 = vmatpush.msra.mxu0 0.0
        %v1015 = vand.u32 %v865, 4294901760
        %1016 = vmatmul.f32.gmra.mxu0 %v1015
        %v1017 = vpop.f32.mrf.mxu0
        %v1018 = vadd.f32 %v901, %v1017
        %v1019 = vand.u32 %v866, 4294901760
        %1020 = vmatmul.f32.gmra.mxu0 %v1019
        %v1021 = vpop.f32.mrf.mxu0
        %v1022 = vadd.f32 %v909, %v1021
        %v1023 = vand.u32 %v867, 4294901760
        %1024 = vmatmul.f32.gmra.mxu0 %v1023
        %v1025 = vpop.f32.mrf.mxu0
        %v1026 = vadd.f32 %v917, %v1025
        %v1027 = vand.u32 %v868, 4294901760
        %1028 = vmatmul.f32.gmra.mxu0 %v1027
        %v1029 = vpop.f32.mrf.mxu0
        %v1030 = vadd.f32 %v925, %v1029
        %v1031 = vand.u32 %v869, 4294901760
        %1032 = vmatmul.f32.gmra.mxu0 %v1031
        %v1033 = vpop.f32.mrf.mxu0
        %v1034 = vadd.f32 %v933, %v1033
        %v1035 = vand.u32 %v870, 4294901760
        %1036 = vmatmul.f32.gmra.mxu0 %v1035
        %v1037 = vpop.f32.mrf.mxu0
        %v1038 = vadd.f32 %v941, %v1037
        %v1039 = vand.u32 %v871, 4294901760
        %1040 = vmatmul.f32.gmra.mxu0 %v1039
        %v1041 = vpop.f32.mrf.mxu0
        %v1042 = vadd.f32 %v949, %v1041
        %v1043 = vand.u32 %v872, 4294901760
        %1044 = vmatmul.f32.gmra.mxu0 %v1043
        %v1045 = vpop.f32.mrf.mxu0
        %v1046 = vadd.f32 %v957, %v1045
        %v1047 = vand.u32 %v873, 4294901760
        %1048 = vmatmul.f32.gmra.mxu0 %v1047
        %v1049 = vpop.f32.mrf.mxu0
        %v1050 = vadd.f32 %v965, %v1049
        %v1051 = vand.u32 %v874, 4294901760
        %1052 = vmatmul.f32.gmra.mxu0 %v1051
        %v1053 = vpop.f32.mrf.mxu0
        %v1054 = vadd.f32 %v973, %v1053
        %v1055 = vand.u32 %v875, 4294901760
        %1056 = vmatmul.f32.gmra.mxu0 %v1055
        %v1057 = vpop.f32.mrf.mxu0
        %v1058 = vadd.f32 %v981, %v1057
        %v1059 = vand.u32 %v876, 4294901760
        %1060 = vmatmul.f32.gmra.mxu0 %v1059
        %v1061 = vpop.f32.mrf.mxu0
        %v1062 = vadd.f32 %v989, %v1061
        %v1063 = vand.u32 %v877, 4294901760
        %1064 = vmatmul.f32.gmra.mxu0 %v1063
        %v1065 = vpop.f32.mrf.mxu0
        %v1066 = vadd.f32 %v997, %v1065
        %1067 = vdwg.mxu0
        %1068 = vmatpush.msra.mxu0 0.0
        %1069 = vmatpush.msra.mxu0 0.0
        %1070 = vmatpush.msra.mxu0 0.0
        %1071 = vmatpush.msra.mxu0 0.0
        %1072 = vmatpush.msra.mxu0 0.0
        %1073 = vmatpush.msra.mxu0 0.0
        %1074 = vmatpush.msra.mxu0 0.0
        %1075 = vmatpush.msra.mxu0 0.0
        %1076 = vmatpush.msra.mxu0 0.0
        %1077 = vmatpush.msra.mxu0 0.0
        %1078 = vmatpush.msra.mxu0 0.0
        %1079 = vmatpush.msra.mxu0 0.0
        %1080 = vmatpush.msra.mxu0 0.0
        %1081 = vmatpush.msra.mxu0 0.0
        %1082 = vmatpush.msra.mxu0 0.0
        %1083 = vmatpush.msra.mxu0 0.0
        %v1084 = vand.u32 %v865, 4294901760
        %v1085 = vsub.f32 %v865, %v1084
        %1086 = vmatmul.f32.gmra.mxu0 %v1085
        %v1087 = vpop.f32.mrf.mxu0
        %v1088 = vadd.f32 %v1018, %v1087
        %v1089 = vand.u32 %v866, 4294901760
        %v1090 = vsub.f32 %v866, %v1089
        %1091 = vmatmul.f32.gmra.mxu0 %v1090
        %v1092 = vpop.f32.mrf.mxu0
        %v1093 = vadd.f32 %v1022, %v1092
        %v1094 = vand.u32 %v867, 4294901760
        %v1095 = vsub.f32 %v867, %v1094
        %1096 = vmatmul.f32.gmra.mxu0 %v1095
        %v1097 = vpop.f32.mrf.mxu0
        %v1098 = vadd.f32 %v1026, %v1097
        %v1099 = vand.u32 %v868, 4294901760
        %v1100 = vsub.f32 %v868, %v1099
        %1101 = vmatmul.f32.gmra.mxu0 %v1100
        %v1102 = vpop.f32.mrf.mxu0
        %v1103 = vadd.f32 %v1030, %v1102
        %v1104 = vand.u32 %v869, 4294901760
        %v1105 = vsub.f32 %v869, %v1104
        %1106 = vmatmul.f32.gmra.mxu0 %v1105
        %v1107 = vpop.f32.mrf.mxu0
        %v1108 = vadd.f32 %v1034, %v1107
        %v1109 = vand.u32 %v870, 4294901760
        %v1110 = vsub.f32 %v870, %v1109
        %1111 = vmatmul.f32.gmra.mxu0 %v1110
        %v1112 = vpop.f32.mrf.mxu0
        %v1113 = vadd.f32 %v1038, %v1112
        %v1114 = vand.u32 %v871, 4294901760
        %v1115 = vsub.f32 %v871, %v1114
        %1116 = vmatmul.f32.gmra.mxu0 %v1115
        %v1117 = vpop.f32.mrf.mxu0
        %v1118 = vadd.f32 %v1042, %v1117
        %v1119 = vand.u32 %v872, 4294901760
        %v1120 = vsub.f32 %v872, %v1119
        %1121 = vmatmul.f32.gmra.mxu0 %v1120
        %v1122 = vpop.f32.mrf.mxu0
        %v1123 = vadd.f32 %v1046, %v1122
        %v1124 = vand.u32 %v873, 4294901760
        %v1125 = vsub.f32 %v873, %v1124
        %1126 = vmatmul.f32.gmra.mxu0 %v1125
        %v1127 = vpop.f32.mrf.mxu0
        %v1128 = vadd.f32 %v1050, %v1127
        %v1129 = vand.u32 %v874, 4294901760
        %v1130 = vsub.f32 %v874, %v1129
        %1131 = vmatmul.f32.gmra.mxu0 %v1130
        %v1132 = vpop.f32.mrf.mxu0
        %v1133 = vadd.f32 %v1054, %v1132
        %v1134 = vand.u32 %v875, 4294901760
        %v1135 = vsub.f32 %v875, %v1134
        %1136 = vmatmul.f32.gmra.mxu0 %v1135
        %v1137 = vpop.f32.mrf.mxu0
        %v1138 = vadd.f32 %v1058, %v1137
        %v1139 = vand.u32 %v876, 4294901760
        %v1140 = vsub.f32 %v876, %v1139
        %1141 = vmatmul.f32.gmra.mxu0 %v1140
        %v1142 = vpop.f32.mrf.mxu0
        %v1143 = vadd.f32 %v1062, %v1142
        %v1144 = vand.u32 %v877, 4294901760
        %v1145 = vsub.f32 %v877, %v1144
        %1146 = vmatmul.f32.gmra.mxu0 %v1145
        %v1147 = vpop.f32.mrf.mxu0
        %v1148 = vadd.f32 %v1066, %v1147
        %1149 = vdwg.mxu0
        %1150 = vmatpush.msra.mxu0 1.0
        %1151 = vmatpush.msra.mxu0 1.0
        %1152 = vmatpush.msra.mxu0 1.0
        %1153 = vmatpush.msra.mxu0 1.0
        %1154 = vmatpush.msra.mxu0 1.0
        %1155 = vmatpush.msra.mxu0 1.0
        %1156 = vmatpush.msra.mxu0 1.0
        %1157 = vmatpush.msra.mxu0 1.0
        %1158 = vmatpush.msra.mxu0 1.0
        %1159 = vmatpush.msra.mxu0 1.0
        %1160 = vmatpush.msra.mxu0 1.0
        %1161 = vmatpush.msra.mxu0 1.0
        %1162 = vmatpush.msra.mxu0 1.0
        %1163 = vmatpush.msra.mxu0 1.0
        %1164 = vmatpush.msra.mxu0 1.0
        %1165 = vmatpush.msra.mxu0 1.0
        %v1166 = vand.u32 %v865, 4294901760
        %v1167 = vsub.f32 %v865, %v1166
        %v1168 = vand.u32 %v1167, 4294901760
        %1169 = vmatmul.f32.gmra.mxu0 %v1168
        %v1170 = vpop.f32.mrf.mxu0
        %v1171 = vadd.f32 %v1088, %v1170
        %v1172 = vand.u32 %v866, 4294901760
        %v1173 = vsub.f32 %v866, %v1172
        %v1174 = vand.u32 %v1173, 4294901760
        %1175 = vmatmul.f32.gmra.mxu0 %v1174
        %v1176 = vpop.f32.mrf.mxu0
        %v1177 = vadd.f32 %v1093, %v1176
        %v1178 = vand.u32 %v867, 4294901760
        %v1179 = vsub.f32 %v867, %v1178
        %v1180 = vand.u32 %v1179, 4294901760
        %1181 = vmatmul.f32.gmra.mxu0 %v1180
        %v1182 = vpop.f32.mrf.mxu0
        %v1183 = vadd.f32 %v1098, %v1182
        %v1184 = vand.u32 %v868, 4294901760
        %v1185 = vsub.f32 %v868, %v1184
        %v1186 = vand.u32 %v1185, 4294901760
        %1187 = vmatmul.f32.gmra.mxu0 %v1186
        %v1188 = vpop.f32.mrf.mxu0
        %v1189 = vadd.f32 %v1103, %v1188
        %v1190 = vand.u32 %v869, 4294901760
        %v1191 = vsub.f32 %v869, %v1190
        %v1192 = vand.u32 %v1191, 4294901760
        %1193 = vmatmul.f32.gmra.mxu0 %v1192
        %v1194 = vpop.f32.mrf.mxu0
        %v1195 = vadd.f32 %v1108, %v1194
        %v1196 = vand.u32 %v870, 4294901760
        %v1197 = vsub.f32 %v870, %v1196
        %v1198 = vand.u32 %v1197, 4294901760
        %1199 = vmatmul.f32.gmra.mxu0 %v1198
        %v1200 = vpop.f32.mrf.mxu0
        %v1201 = vadd.f32 %v1113, %v1200
        %v1202 = vand.u32 %v871, 4294901760
        %v1203 = vsub.f32 %v871, %v1202
        %v1204 = vand.u32 %v1203, 4294901760
        %1205 = vmatmul.f32.gmra.mxu0 %v1204
        %v1206 = vpop.f32.mrf.mxu0
        %v1207 = vadd.f32 %v1118, %v1206
        %v1208 = vand.u32 %v872, 4294901760
        %v1209 = vsub.f32 %v872, %v1208
        %v1210 = vand.u32 %v1209, 4294901760
        %1211 = vmatmul.f32.gmra.mxu0 %v1210
        %v1212 = vpop.f32.mrf.mxu0
        %v1213 = vadd.f32 %v1123, %v1212
        %v1214 = vand.u32 %v873, 4294901760
        %v1215 = vsub.f32 %v873, %v1214
        %v1216 = vand.u32 %v1215, 4294901760
        %1217 = vmatmul.f32.gmra.mxu0 %v1216
        %v1218 = vpop.f32.mrf.mxu0
        %v1219 = vadd.f32 %v1128, %v1218
        %v1220 = vand.u32 %v874, 4294901760
        %v1221 = vsub.f32 %v874, %v1220
        %v1222 = vand.u32 %v1221, 4294901760
        %1223 = vmatmul.f32.gmra.mxu0 %v1222
        %v1224 = vpop.f32.mrf.mxu0
        %v1225 = vadd.f32 %v1133, %v1224
        %v1226 = vand.u32 %v875, 4294901760
        %v1227 = vsub.f32 %v875, %v1226
        %v1228 = vand.u32 %v1227, 4294901760
        %1229 = vmatmul.f32.gmra.mxu0 %v1228
        %v1230 = vpop.f32.mrf.mxu0
        %v1231 = vadd.f32 %v1138, %v1230
        %v1232 = vand.u32 %v876, 4294901760
        %v1233 = vsub.f32 %v876, %v1232
        %v1234 = vand.u32 %v1233, 4294901760
        %1235 = vmatmul.f32.gmra.mxu0 %v1234
        %v1236 = vpop.f32.mrf.mxu0
        %v1237 = vadd.f32 %v1143, %v1236
        %v1238 = vand.u32 %v877, 4294901760
        %v1239 = vsub.f32 %v877, %v1238
        %v1240 = vand.u32 %v1239, 4294901760
        %1241 = vmatmul.f32.gmra.mxu0 %v1240
        %v1242 = vpop.f32.mrf.mxu0
        %v1243 = vadd.f32 %v1148, %v1242
        %1244 = vdwg.mxu0
        %1245 = vmatpush.msra.mxu0 0.0
        %1246 = vmatpush.msra.mxu0 0.0
        %1247 = vmatpush.msra.mxu0 0.0
        %1248 = vmatpush.msra.mxu0 0.0
        %1249 = vmatpush.msra.mxu0 0.0
        %1250 = vmatpush.msra.mxu0 0.0
        %1251 = vmatpush.msra.mxu0 0.0
        %1252 = vmatpush.msra.mxu0 0.0
        %1253 = vmatpush.msra.mxu0 0.0
        %1254 = vmatpush.msra.mxu0 0.0
        %1255 = vmatpush.msra.mxu0 0.0
        %1256 = vmatpush.msra.mxu0 0.0
        %1257 = vmatpush.msra.mxu0 0.0
        %1258 = vmatpush.msra.mxu0 0.0
        %1259 = vmatpush.msra.mxu0 0.0
        %1260 = vmatpush.msra.mxu0 0.0
        %v1261 = vand.u32 %v865, 4294901760
        %1262 = vmatmul.f32.gmra.mxu0 %v1261
        %v1263 = vpop.f32.mrf.mxu0
        %v1264 = vadd.f32 %v1171, %v1263
        %v1265 = vand.u32 %v866, 4294901760
        %1266 = vmatmul.f32.gmra.mxu0 %v1265
        %v1267 = vpop.f32.mrf.mxu0
        %v1268 = vadd.f32 %v1177, %v1267
        %v1269 = vand.u32 %v867, 4294901760
        %1270 = vmatmul.f32.gmra.mxu0 %v1269
        %v1271 = vpop.f32.mrf.mxu0
        %v1272 = vadd.f32 %v1183, %v1271
        %v1273 = vand.u32 %v868, 4294901760
        %1274 = vmatmul.f32.gmra.mxu0 %v1273
        %v1275 = vpop.f32.mrf.mxu0
        %v1276 = vadd.f32 %v1189, %v1275
        %v1277 = vand.u32 %v869, 4294901760
        %1278 = vmatmul.f32.gmra.mxu0 %v1277
        %v1279 = vpop.f32.mrf.mxu0
        %v1280 = vadd.f32 %v1195, %v1279
        %v1281 = vand.u32 %v870, 4294901760
        %1282 = vmatmul.f32.gmra.mxu0 %v1281
        %v1283 = vpop.f32.mrf.mxu0
        %v1284 = vadd.f32 %v1201, %v1283
        %v1285 = vand.u32 %v871, 4294901760
        %1286 = vmatmul.f32.gmra.mxu0 %v1285
        %v1287 = vpop.f32.mrf.mxu0
        %v1288 = vadd.f32 %v1207, %v1287
        %v1289 = vand.u32 %v872, 4294901760
        %1290 = vmatmul.f32.gmra.mxu0 %v1289
        %v1291 = vpop.f32.mrf.mxu0
        %v1292 = vadd.f32 %v1213, %v1291
        %v1293 = vand.u32 %v873, 4294901760
        %1294 = vmatmul.f32.gmra.mxu0 %v1293
        %v1295 = vpop.f32.mrf.mxu0
        %v1296 = vadd.f32 %v1219, %v1295
        %v1297 = vand.u32 %v874, 4294901760
        %1298 = vmatmul.f32.gmra.mxu0 %v1297
        %v1299 = vpop.f32.mrf.mxu0
        %v1300 = vadd.f32 %v1225, %v1299
        %v1301 = vand.u32 %v875, 4294901760
        %1302 = vmatmul.f32.gmra.mxu0 %v1301
        %v1303 = vpop.f32.mrf.mxu0
        %v1304 = vadd.f32 %v1231, %v1303
        %v1305 = vand.u32 %v876, 4294901760
        %1306 = vmatmul.f32.gmra.mxu0 %v1305
        %v1307 = vpop.f32.mrf.mxu0
        %v1308 = vadd.f32 %v1237, %v1307
        %v1309 = vand.u32 %v877, 4294901760
        %1310 = vmatmul.f32.gmra.mxu0 %v1309
        %v1311 = vpop.f32.mrf.mxu0
        %v1312 = vadd.f32 %v1243, %v1311
        %1313 = vdwg.mxu0
        %1314 = vmatpush.msra.mxu0 1.0
        %1315 = vmatpush.msra.mxu0 1.0
        %1316 = vmatpush.msra.mxu0 1.0
        %1317 = vmatpush.msra.mxu0 1.0
        %1318 = vmatpush.msra.mxu0 1.0
        %1319 = vmatpush.msra.mxu0 1.0
        %1320 = vmatpush.msra.mxu0 1.0
        %1321 = vmatpush.msra.mxu0 1.0
        %1322 = vmatpush.msra.mxu0 1.0
        %1323 = vmatpush.msra.mxu0 1.0
        %1324 = vmatpush.msra.mxu0 1.0
        %1325 = vmatpush.msra.mxu0 1.0
        %1326 = vmatpush.msra.mxu0 1.0
        %1327 = vmatpush.msra.mxu0 1.0
        %1328 = vmatpush.msra.mxu0 1.0
        %1329 = vmatpush.msra.mxu0 1.0
        %v1330 = vand.u32 %v865, 4294901760
        %1331 = vmatmul.f32.gmra.mxu0 %v1330
        %v1332 = vpop.f32.mrf.mxu0
        %v1333 = vadd.f32 %v1264, %v1332
        %v1334 = vand.u32 %v866, 4294901760
        %1335 = vmatmul.f32.gmra.mxu0 %v1334
        %v1336 = vpop.f32.mrf.mxu0
        %v1337 = vadd.f32 %v1268, %v1336
        %v1338 = vand.u32 %v867, 4294901760
        %1339 = vmatmul.f32.gmra.mxu0 %v1338
        %v1340 = vpop.f32.mrf.mxu0
        %v1341 = vadd.f32 %v1272, %v1340
        %v1342 = vand.u32 %v868, 4294901760
        %1343 = vmatmul.f32.gmra.mxu0 %v1342
        %v1344 = vpop.f32.mrf.mxu0
        %v1345 = vadd.f32 %v1276, %v1344
        %v1346 = vand.u32 %v869, 4294901760
        %1347 = vmatmul.f32.gmra.mxu0 %v1346
        %v1348 = vpop.f32.mrf.mxu0
        %v1349 = vadd.f32 %v1280, %v1348
        %v1350 = vand.u32 %v870, 4294901760
        %1351 = vmatmul.f32.gmra.mxu0 %v1350
        %v1352 = vpop.f32.mrf.mxu0
        %v1353 = vadd.f32 %v1284, %v1352
        %v1354 = vand.u32 %v871, 4294901760
        %1355 = vmatmul.f32.gmra.mxu0 %v1354
        %v1356 = vpop.f32.mrf.mxu0
        %v1357 = vadd.f32 %v1288, %v1356
        %v1358 = vand.u32 %v872, 4294901760
        %1359 = vmatmul.f32.gmra.mxu0 %v1358
        %v1360 = vpop.f32.mrf.mxu0
        %v1361 = vadd.f32 %v1292, %v1360
        %v1362 = vand.u32 %v873, 4294901760
        %1363 = vmatmul.f32.gmra.mxu0 %v1362
        %v1364 = vpop.f32.mrf.mxu0
        %v1365 = vadd.f32 %v1296, %v1364
        %v1366 = vand.u32 %v874, 4294901760
        %1367 = vmatmul.f32.gmra.mxu0 %v1366
        %v1368 = vpop.f32.mrf.mxu0
        %v1369 = vadd.f32 %v1300, %v1368
        %v1370 = vand.u32 %v875, 4294901760
        %1371 = vmatmul.f32.gmra.mxu0 %v1370
        %v1372 = vpop.f32.mrf.mxu0
        %v1373 = vadd.f32 %v1304, %v1372
        %v1374 = vand.u32 %v876, 4294901760
        %1375 = vmatmul.f32.gmra.mxu0 %v1374
        %v1376 = vpop.f32.mrf.mxu0
        %v1377 = vadd.f32 %v1308, %v1376
        %v1378 = vand.u32 %v877, 4294901760
        %1379 = vmatmul.f32.gmra.mxu0 %v1378
        %v1380 = vpop.f32.mrf.mxu0
        %v1381 = vadd.f32 %v1312, %v1380
        %1382 = vdwg.mxu0
        %v1383 = vxor.u32 %v815, 2147483648
        %v1384 = vxor.u32 %v819, 2147483648
        %v1385 = vxor.u32 %v823, 2147483648
        %v1386 = vxor.u32 %v827, 2147483648
        %v1387 = vxor.u32 %v831, 2147483648
        %v1388 = vxor.u32 %v835, 2147483648
        %v1389 = vxor.u32 %v839, 2147483648
        %v1390 = vxor.u32 %v843, 2147483648
        %v1391 = vxor.u32 %v847, 2147483648
        %v1392 = vxor.u32 %v851, 2147483648
        %v1393 = vxor.u32 %v855, 2147483648
        %v1394 = vxor.u32 %v859, 2147483648
        %v1395 = vxor.u32 %v863, 2147483648
        %v1396 = vmul.f32 %v1383, 1.442695
        %v1397 = vpow.pop %v1396
        %v1398 = vmul.f32 %v1384, 1.442695
        %v1399 = vpow.pop %v1398
        %v1400 = vmul.f32 %v1385, 1.442695
        %v1401 = vpow.pop %v1400
        %v1402 = vmul.f32 %v1386, 1.442695
        %v1403 = vpow.pop %v1402
        %v1404 = vmul.f32 %v1387, 1.442695
        %v1405 = vpow.pop %v1404
        %v1406 = vmul.f32 %v1388, 1.442695
        %v1407 = vpow.pop %v1406
        %v1408 = vmul.f32 %v1389, 1.442695
        %v1409 = vpow.pop %v1408
        %v1410 = vmul.f32 %v1390, 1.442695
        %v1411 = vpow.pop %v1410
        %v1412 = vmul.f32 %v1391, 1.442695
        %v1413 = vpow.pop %v1412
        %v1414 = vmul.f32 %v1392, 1.442695
        %v1415 = vpow.pop %v1414
        %v1416 = vmul.f32 %v1393, 1.442695
        %v1417 = vpow.pop %v1416
        %v1418 = vmul.f32 %v1394, 1.442695
        %v1419 = vpow.pop %v1418
        %v1420 = vmul.f32 %v1395, 1.442695
        %v1421 = vpow.pop %v1420
        %v1422 = vadd.f32 %v1397, 1.0
        %v1423 = vadd.f32 %v1399, 1.0
        %v1424 = vadd.f32 %v1401, 1.0
        %v1425 = vadd.f32 %v1403, 1.0
        %v1426 = vadd.f32 %v1405, 1.0
        %v1427 = vadd.f32 %v1407, 1.0
        %v1428 = vadd.f32 %v1409, 1.0
        %v1429 = vadd.f32 %v1411, 1.0
        %v1430 = vadd.f32 %v1413, 1.0
        %v1431 = vadd.f32 %v1415, 1.0
        %v1432 = vadd.f32 %v1417, 1.0
        %v1433 = vadd.f32 %v1419, 1.0
        %v1434 = vadd.f32 %v1421, 1.0
        %v1435 = vrcp.pop %v1422
        %v1436 = vmul.f32 %v1422, %v1435
        %v1437 = vsub.f32 1.0, %v1436
        %v1438 = vmul.f32 %v1435, %v1437
        %v1439 = vadd.f32 %v1435, %v1438
        %vm1440 = vweird.f32 %v1422
        %vm1441 = vweird.f32 %v1435
        %vm1442 = vmor %vm1440, %vm1441
        %v1443 = vsel %vm1442, %v1435, %v1439
        %v1444 = vand.u32 2147483647, %v1422
        %vm1445 = vcmp.eq.f32.partialorder %v1444, 8.507059e+37
        %v1446 = vand.u32 %v1422, 2147483648
        %v1447 = vor.u32 1.1754944e-38, %v1446
        %v1448 = vsel %vm1445, %v1447, %v1443
        %v1449 = vmul.f32 1.0, %v1448
        %v1450 = vrcp.pop %v1423
        %v1451 = vmul.f32 %v1423, %v1450
        %v1452 = vsub.f32 1.0, %v1451
        %v1453 = vmul.f32 %v1450, %v1452
        %v1454 = vadd.f32 %v1450, %v1453
        %vm1455 = vweird.f32 %v1423
        %vm1456 = vweird.f32 %v1450
        %vm1457 = vmor %vm1455, %vm1456
        %v1458 = vsel %vm1457, %v1450, %v1454
        %v1459 = vand.u32 2147483647, %v1423
        %vm1460 = vcmp.eq.f32.partialorder %v1459, 8.507059e+37
        %v1461 = vand.u32 %v1423, 2147483648
        %v1462 = vor.u32 1.1754944e-38, %v1461
        %v1463 = vsel %vm1460, %v1462, %v1458
        %v1464 = vmul.f32 1.0, %v1463
        %v1465 = vrcp.pop %v1424
        %v1466 = vmul.f32 %v1424, %v1465
        %v1467 = vsub.f32 1.0, %v1466
        %v1468 = vmul.f32 %v1465, %v1467
        %v1469 = vadd.f32 %v1465, %v1468
        %vm1470 = vweird.f32 %v1424
        %vm1471 = vweird.f32 %v1465
        %vm1472 = vmor %vm1470, %vm1471
        %v1473 = vsel %vm1472, %v1465, %v1469
        %v1474 = vand.u32 2147483647, %v1424
        %vm1475 = vcmp.eq.f32.partialorder %v1474, 8.507059e+37
        %v1476 = vand.u32 %v1424, 2147483648
        %v1477 = vor.u32 1.1754944e-38, %v1476
        %v1478 = vsel %vm1475, %v1477, %v1473
        %v1479 = vmul.f32 1.0, %v1478
        %v1480 = vrcp.pop %v1425
        %v1481 = vmul.f32 %v1425, %v1480
        %v1482 = vsub.f32 1.0, %v1481
        %v1483 = vmul.f32 %v1480, %v1482
        %v1484 = vadd.f32 %v1480, %v1483
        %vm1485 = vweird.f32 %v1425
        %vm1486 = vweird.f32 %v1480
        %vm1487 = vmor %vm1485, %vm1486
        %v1488 = vsel %vm1487, %v1480, %v1484
        %v1489 = vand.u32 2147483647, %v1425
        %vm1490 = vcmp.eq.f32.partialorder %v1489, 8.507059e+37
        %v1491 = vand.u32 %v1425, 2147483648
        %v1492 = vor.u32 1.1754944e-38, %v1491
        %v1493 = vsel %vm1490, %v1492, %v1488
        %v1494 = vmul.f32 1.0, %v1493
        %v1495 = vrcp.pop %v1426
        %v1496 = vmul.f32 %v1426, %v1495
        %v1497 = vsub.f32 1.0, %v1496
        %v1498 = vmul.f32 %v1495, %v1497
        %v1499 = vadd.f32 %v1495, %v1498
        %vm1500 = vweird.f32 %v1426
        %vm1501 = vweird.f32 %v1495
        %vm1502 = vmor %vm1500, %vm1501
        %v1503 = vsel %vm1502, %v1495, %v1499
        %v1504 = vand.u32 2147483647, %v1426
        %vm1505 = vcmp.eq.f32.partialorder %v1504, 8.507059e+37
        %v1506 = vand.u32 %v1426, 2147483648
        %v1507 = vor.u32 1.1754944e-38, %v1506
        %v1508 = vsel %vm1505, %v1507, %v1503
        %v1509 = vmul.f32 1.0, %v1508
        %v1510 = vrcp.pop %v1427
        %v1511 = vmul.f32 %v1427, %v1510
        %v1512 = vsub.f32 1.0, %v1511
        %v1513 = vmul.f32 %v1510, %v1512
        %v1514 = vadd.f32 %v1510, %v1513
        %vm1515 = vweird.f32 %v1427
        %vm1516 = vweird.f32 %v1510
        %vm1517 = vmor %vm1515, %vm1516
        %v1518 = vsel %vm1517, %v1510, %v1514
        %v1519 = vand.u32 2147483647, %v1427
        %vm1520 = vcmp.eq.f32.partialorder %v1519, 8.507059e+37
        %v1521 = vand.u32 %v1427, 2147483648
        %v1522 = vor.u32 1.1754944e-38, %v1521
        %v1523 = vsel %vm1520, %v1522, %v1518
        %v1524 = vmul.f32 1.0, %v1523
        %v1525 = vrcp.pop %v1428
        %v1526 = vmul.f32 %v1428, %v1525
        %v1527 = vsub.f32 1.0, %v1526
        %v1528 = vmul.f32 %v1525, %v1527
        %v1529 = vadd.f32 %v1525, %v1528
        %vm1530 = vweird.f32 %v1428
        %vm1531 = vweird.f32 %v1525
        %vm1532 = vmor %vm1530, %vm1531
        %v1533 = vsel %vm1532, %v1525, %v1529
        %v1534 = vand.u32 2147483647, %v1428
        %vm1535 = vcmp.eq.f32.partialorder %v1534, 8.507059e+37
        %v1536 = vand.u32 %v1428, 2147483648
        %v1537 = vor.u32 1.1754944e-38, %v1536
        %v1538 = vsel %vm1535, %v1537, %v1533
        %v1539 = vmul.f32 1.0, %v1538
        %v1540 = vrcp.pop %v1429
        %v1541 = vmul.f32 %v1429, %v1540
        %v1542 = vsub.f32 1.0, %v1541
        %v1543 = vmul.f32 %v1540, %v1542
        %v1544 = vadd.f32 %v1540, %v1543
        %vm1545 = vweird.f32 %v1429
        %vm1546 = vweird.f32 %v1540
        %vm1547 = vmor %vm1545, %vm1546
        %v1548 = vsel %vm1547, %v1540, %v1544
        %v1549 = vand.u32 2147483647, %v1429
        %vm1550 = vcmp.eq.f32.partialorder %v1549, 8.507059e+37
        %v1551 = vand.u32 %v1429, 2147483648
        %v1552 = vor.u32 1.1754944e-38, %v1551
        %v1553 = vsel %vm1550, %v1552, %v1548
        %v1554 = vmul.f32 1.0, %v1553
        %v1555 = vrcp.pop %v1430
        %v1556 = vmul.f32 %v1430, %v1555
        %v1557 = vsub.f32 1.0, %v1556
        %v1558 = vmul.f32 %v1555, %v1557
        %v1559 = vadd.f32 %v1555, %v1558
        %vm1560 = vweird.f32 %v1430
        %vm1561 = vweird.f32 %v1555
        %vm1562 = vmor %vm1560, %vm1561
        %v1563 = vsel %vm1562, %v1555, %v1559
        %v1564 = vand.u32 2147483647, %v1430
        %vm1565 = vcmp.eq.f32.partialorder %v1564, 8.507059e+37
        %v1566 = vand.u32 %v1430, 2147483648
        %v1567 = vor.u32 1.1754944e-38, %v1566
        %v1568 = vsel %vm1565, %v1567, %v1563
        %v1569 = vmul.f32 1.0, %v1568
        %v1570 = vrcp.pop %v1431
        %v1571 = vmul.f32 %v1431, %v1570
        %v1572 = vsub.f32 1.0, %v1571
        %v1573 = vmul.f32 %v1570, %v1572
        %v1574 = vadd.f32 %v1570, %v1573
        %vm1575 = vweird.f32 %v1431
        %vm1576 = vweird.f32 %v1570
        %vm1577 = vmor %vm1575, %vm1576
        %v1578 = vsel %vm1577, %v1570, %v1574
        %v1579 = vand.u32 2147483647, %v1431
        %vm1580 = vcmp.eq.f32.partialorder %v1579, 8.507059e+37
        %v1581 = vand.u32 %v1431, 2147483648
        %v1582 = vor.u32 1.1754944e-38, %v1581
        %v1583 = vsel %vm1580, %v1582, %v1578
        %v1584 = vmul.f32 1.0, %v1583
        %v1585 = vrcp.pop %v1432
        %v1586 = vmul.f32 %v1432, %v1585
        %v1587 = vsub.f32 1.0, %v1586
        %v1588 = vmul.f32 %v1585, %v1587
        %v1589 = vadd.f32 %v1585, %v1588
        %vm1590 = vweird.f32 %v1432
        %vm1591 = vweird.f32 %v1585
        %vm1592 = vmor %vm1590, %vm1591
        %v1593 = vsel %vm1592, %v1585, %v1589
        %v1594 = vand.u32 2147483647, %v1432
        %vm1595 = vcmp.eq.f32.partialorder %v1594, 8.507059e+37
        %v1596 = vand.u32 %v1432, 2147483648
        %v1597 = vor.u32 1.1754944e-38, %v1596
        %v1598 = vsel %vm1595, %v1597, %v1593
        %v1599 = vmul.f32 1.0, %v1598
        %v1600 = vrcp.pop %v1433
        %v1601 = vmul.f32 %v1433, %v1600
        %v1602 = vsub.f32 1.0, %v1601
        %v1603 = vmul.f32 %v1600, %v1602
        %v1604 = vadd.f32 %v1600, %v1603
        %vm1605 = vweird.f32 %v1433
        %vm1606 = vweird.f32 %v1600
        %vm1607 = vmor %vm1605, %vm1606
        %v1608 = vsel %vm1607, %v1600, %v1604
        %v1609 = vand.u32 2147483647, %v1433
        %vm1610 = vcmp.eq.f32.partialorder %v1609, 8.507059e+37
        %v1611 = vand.u32 %v1433, 2147483648
        %v1612 = vor.u32 1.1754944e-38, %v1611
        %v1613 = vsel %vm1610, %v1612, %v1608
        %v1614 = vmul.f32 1.0, %v1613
        %v1615 = vrcp.pop %v1434
        %v1616 = vmul.f32 %v1434, %v1615
        %v1617 = vsub.f32 1.0, %v1616
        %v1618 = vmul.f32 %v1615, %v1617
        %v1619 = vadd.f32 %v1615, %v1618
        %vm1620 = vweird.f32 %v1434
        %vm1621 = vweird.f32 %v1615
        %vm1622 = vmor %vm1620, %vm1621
        %v1623 = vsel %vm1622, %v1615, %v1619
        %v1624 = vand.u32 2147483647, %v1434
        %vm1625 = vcmp.eq.f32.partialorder %v1624, 8.507059e+37
        %v1626 = vand.u32 %v1434, 2147483648
        %v1627 = vor.u32 1.1754944e-38, %v1626
        %v1628 = vsel %vm1625, %v1627, %v1623
        %v1629 = vmul.f32 1.0, %v1628
        %v1630 = vxor.u32 %v1333, 2147483648
        %v1631 = vxor.u32 %v1337, 2147483648
        %v1632 = vxor.u32 %v1341, 2147483648
        %v1633 = vxor.u32 %v1345, 2147483648
        %v1634 = vxor.u32 %v1349, 2147483648
        %v1635 = vxor.u32 %v1353, 2147483648
        %v1636 = vxor.u32 %v1357, 2147483648
        %v1637 = vxor.u32 %v1361, 2147483648
        %v1638 = vxor.u32 %v1365, 2147483648
        %v1639 = vxor.u32 %v1369, 2147483648
        %v1640 = vxor.u32 %v1373, 2147483648
        %v1641 = vxor.u32 %v1377, 2147483648
        %v1642 = vxor.u32 %v1381, 2147483648
        %v1643 = vmul.f32 %v1630, 1.442695
        %v1644 = vpow.pop %v1643
        %v1645 = vmul.f32 %v1631, 1.442695
        %v1646 = vpow.pop %v1645
        %v1647 = vmul.f32 %v1632, 1.442695
        %v1648 = vpow.pop %v1647
        %v1649 = vmul.f32 %v1633, 1.442695
        %v1650 = vpow.pop %v1649
        %v1651 = vmul.f32 %v1634, 1.442695
        %v1652 = vpow.pop %v1651
        %v1653 = vmul.f32 %v1635, 1.442695
        %v1654 = vpow.pop %v1653
        %v1655 = vmul.f32 %v1636, 1.442695
        %v1656 = vpow.pop %v1655
        %v1657 = vmul.f32 %v1637, 1.442695
        %v1658 = vpow.pop %v1657
        %v1659 = vmul.f32 %v1638, 1.442695
        %v1660 = vpow.pop %v1659
        %v1661 = vmul.f32 %v1639, 1.442695
        %v1662 = vpow.pop %v1661
        %v1663 = vmul.f32 %v1640, 1.442695
        %v1664 = vpow.pop %v1663
        %v1665 = vmul.f32 %v1641, 1.442695
        %v1666 = vpow.pop %v1665
        %v1667 = vmul.f32 %v1642, 1.442695
        %v1668 = vpow.pop %v1667
        %v1669 = vadd.f32 %v1644, 1.0
        %v1670 = vadd.f32 %v1646, 1.0
        %v1671 = vadd.f32 %v1648, 1.0
        %v1672 = vadd.f32 %v1650, 1.0
        %v1673 = vadd.f32 %v1652, 1.0
        %v1674 = vadd.f32 %v1654, 1.0
        %v1675 = vadd.f32 %v1656, 1.0
        %v1676 = vadd.f32 %v1658, 1.0
        %v1677 = vadd.f32 %v1660, 1.0
        %v1678 = vadd.f32 %v1662, 1.0
        %v1679 = vadd.f32 %v1664, 1.0
        %v1680 = vadd.f32 %v1666, 1.0
        %v1681 = vadd.f32 %v1668, 1.0
        %v1682 = vrcp.pop %v1669
        %v1683 = vmul.f32 %v1669, %v1682
        %v1684 = vsub.f32 1.0, %v1683
        %v1685 = vmul.f32 %v1682, %v1684
        %v1686 = vadd.f32 %v1682, %v1685
        %vm1687 = vweird.f32 %v1669
        %vm1688 = vweird.f32 %v1682
        %vm1689 = vmor %vm1687, %vm1688
        %v1690 = vsel %vm1689, %v1682, %v1686
        %v1691 = vand.u32 2147483647, %v1669
        %vm1692 = vcmp.eq.f32.partialorder %v1691, 8.507059e+37
        %v1693 = vand.u32 %v1669, 2147483648
        %v1694 = vor.u32 1.1754944e-38, %v1693
        %v1695 = vsel %vm1692, %v1694, %v1690
        %v1696 = vmul.f32 1.0, %v1695
        %v1697 = vrcp.pop %v1670
        %v1698 = vmul.f32 %v1670, %v1697
        %v1699 = vsub.f32 1.0, %v1698
        %v1700 = vmul.f32 %v1697, %v1699
        %v1701 = vadd.f32 %v1697, %v1700
        %vm1702 = vweird.f32 %v1670
        %vm1703 = vweird.f32 %v1697
        %vm1704 = vmor %vm1702, %vm1703
        %v1705 = vsel %vm1704, %v1697, %v1701
        %v1706 = vand.u32 2147483647, %v1670
        %vm1707 = vcmp.eq.f32.partialorder %v1706, 8.507059e+37
        %v1708 = vand.u32 %v1670, 2147483648
        %v1709 = vor.u32 1.1754944e-38, %v1708
        %v1710 = vsel %vm1707, %v1709, %v1705
        %v1711 = vmul.f32 1.0, %v1710
        %v1712 = vrcp.pop %v1671
        %v1713 = vmul.f32 %v1671, %v1712
        %v1714 = vsub.f32 1.0, %v1713
        %v1715 = vmul.f32 %v1712, %v1714
        %v1716 = vadd.f32 %v1712, %v1715
        %vm1717 = vweird.f32 %v1671
        %vm1718 = vweird.f32 %v1712
        %vm1719 = vmor %vm1717, %vm1718
        %v1720 = vsel %vm1719, %v1712, %v1716
        %v1721 = vand.u32 2147483647, %v1671
        %vm1722 = vcmp.eq.f32.partialorder %v1721, 8.507059e+37
        %v1723 = vand.u32 %v1671, 2147483648
        %v1724 = vor.u32 1.1754944e-38, %v1723
        %v1725 = vsel %vm1722, %v1724, %v1720
        %v1726 = vmul.f32 1.0, %v1725
        %v1727 = vrcp.pop %v1672
        %v1728 = vmul.f32 %v1672, %v1727
        %v1729 = vsub.f32 1.0, %v1728
        %v1730 = vmul.f32 %v1727, %v1729
        %v1731 = vadd.f32 %v1727, %v1730
        %vm1732 = vweird.f32 %v1672
        %vm1733 = vweird.f32 %v1727
        %vm1734 = vmor %vm1732, %vm1733
        %v1735 = vsel %vm1734, %v1727, %v1731
        %v1736 = vand.u32 2147483647, %v1672
        %vm1737 = vcmp.eq.f32.partialorder %v1736, 8.507059e+37
        %v1738 = vand.u32 %v1672, 2147483648
        %v1739 = vor.u32 1.1754944e-38, %v1738
        %v1740 = vsel %vm1737, %v1739, %v1735
        %v1741 = vmul.f32 1.0, %v1740
        %v1742 = vrcp.pop %v1673
        %v1743 = vmul.f32 %v1673, %v1742
        %v1744 = vsub.f32 1.0, %v1743
        %v1745 = vmul.f32 %v1742, %v1744
        %v1746 = vadd.f32 %v1742, %v1745
        %vm1747 = vweird.f32 %v1673
        %vm1748 = vweird.f32 %v1742
        %vm1749 = vmor %vm1747, %vm1748
        %v1750 = vsel %vm1749, %v1742, %v1746
        %v1751 = vand.u32 2147483647, %v1673
        %vm1752 = vcmp.eq.f32.partialorder %v1751, 8.507059e+37
        %v1753 = vand.u32 %v1673, 2147483648
        %v1754 = vor.u32 1.1754944e-38, %v1753
        %v1755 = vsel %vm1752, %v1754, %v1750
        %v1756 = vmul.f32 1.0, %v1755
        %v1757 = vrcp.pop %v1674
        %v1758 = vmul.f32 %v1674, %v1757
        %v1759 = vsub.f32 1.0, %v1758
        %v1760 = vmul.f32 %v1757, %v1759
        %v1761 = vadd.f32 %v1757, %v1760
        %vm1762 = vweird.f32 %v1674
        %vm1763 = vweird.f32 %v1757
        %vm1764 = vmor %vm1762, %vm1763
        %v1765 = vsel %vm1764, %v1757, %v1761
        %v1766 = vand.u32 2147483647, %v1674
        %vm1767 = vcmp.eq.f32.partialorder %v1766, 8.507059e+37
        %v1768 = vand.u32 %v1674, 2147483648
        %v1769 = vor.u32 1.1754944e-38, %v1768
        %v1770 = vsel %vm1767, %v1769, %v1765
        %v1771 = vmul.f32 1.0, %v1770
        %v1772 = vrcp.pop %v1675
        %v1773 = vmul.f32 %v1675, %v1772
        %v1774 = vsub.f32 1.0, %v1773
        %v1775 = vmul.f32 %v1772, %v1774
        %v1776 = vadd.f32 %v1772, %v1775
        %vm1777 = vweird.f32 %v1675
        %vm1778 = vweird.f32 %v1772
        %vm1779 = vmor %vm1777, %vm1778
        %v1780 = vsel %vm1779, %v1772, %v1776
        %v1781 = vand.u32 2147483647, %v1675
        %vm1782 = vcmp.eq.f32.partialorder %v1781, 8.507059e+37
        %v1783 = vand.u32 %v1675, 2147483648
        %v1784 = vor.u32 1.1754944e-38, %v1783
        %v1785 = vsel %vm1782, %v1784, %v1780
        %v1786 = vmul.f32 1.0, %v1785
        %v1787 = vrcp.pop %v1676
        %v1788 = vmul.f32 %v1676, %v1787
        %v1789 = vsub.f32 1.0, %v1788
        %v1790 = vmul.f32 %v1787, %v1789
        %v1791 = vadd.f32 %v1787, %v1790
        %vm1792 = vweird.f32 %v1676
        %vm1793 = vweird.f32 %v1787
        %vm1794 = vmor %vm1792, %vm1793
        %v1795 = vsel %vm1794, %v1787, %v1791
        %v1796 = vand.u32 2147483647, %v1676
        %vm1797 = vcmp.eq.f32.partialorder %v1796, 8.507059e+37
        %v1798 = vand.u32 %v1676, 2147483648
        %v1799 = vor.u32 1.1754944e-38, %v1798
        %v1800 = vsel %vm1797, %v1799, %v1795
        %v1801 = vmul.f32 1.0, %v1800
        %v1802 = vrcp.pop %v1677
        %v1803 = vmul.f32 %v1677, %v1802
        %v1804 = vsub.f32 1.0, %v1803
        %v1805 = vmul.f32 %v1802, %v1804
        %v1806 = vadd.f32 %v1802, %v1805
        %vm1807 = vweird.f32 %v1677
        %vm1808 = vweird.f32 %v1802
        %vm1809 = vmor %vm1807, %vm1808
        %v1810 = vsel %vm1809, %v1802, %v1806
        %v1811 = vand.u32 2147483647, %v1677
        %vm1812 = vcmp.eq.f32.partialorder %v1811, 8.507059e+37
        %v1813 = vand.u32 %v1677, 2147483648
        %v1814 = vor.u32 1.1754944e-38, %v1813
        %v1815 = vsel %vm1812, %v1814, %v1810
        %v1816 = vmul.f32 1.0, %v1815
        %v1817 = vrcp.pop %v1678
        %v1818 = vmul.f32 %v1678, %v1817
        %v1819 = vsub.f32 1.0, %v1818
        %v1820 = vmul.f32 %v1817, %v1819
        %v1821 = vadd.f32 %v1817, %v1820
        %vm1822 = vweird.f32 %v1678
        %vm1823 = vweird.f32 %v1817
        %vm1824 = vmor %vm1822, %vm1823
        %v1825 = vsel %vm1824, %v1817, %v1821
        %v1826 = vand.u32 2147483647, %v1678
        %vm1827 = vcmp.eq.f32.partialorder %v1826, 8.507059e+37
        %v1828 = vand.u32 %v1678, 2147483648
        %v1829 = vor.u32 1.1754944e-38, %v1828
        %v1830 = vsel %vm1827, %v1829, %v1825
        %v1831 = vmul.f32 1.0, %v1830
        %v1832 = vrcp.pop %v1679
        %v1833 = vmul.f32 %v1679, %v1832
        %v1834 = vsub.f32 1.0, %v1833
        %v1835 = vmul.f32 %v1832, %v1834
        %v1836 = vadd.f32 %v1832, %v1835
        %vm1837 = vweird.f32 %v1679
        %vm1838 = vweird.f32 %v1832
        %vm1839 = vmor %vm1837, %vm1838
        %v1840 = vsel %vm1839, %v1832, %v1836
        %v1841 = vand.u32 2147483647, %v1679
        %vm1842 = vcmp.eq.f32.partialorder %v1841, 8.507059e+37
        %v1843 = vand.u32 %v1679, 2147483648
        %v1844 = vor.u32 1.1754944e-38, %v1843
        %v1845 = vsel %vm1842, %v1844, %v1840
        %v1846 = vmul.f32 1.0, %v1845
        %v1847 = vrcp.pop %v1680
        %v1848 = vmul.f32 %v1680, %v1847
        %v1849 = vsub.f32 1.0, %v1848
        %v1850 = vmul.f32 %v1847, %v1849
        %v1851 = vadd.f32 %v1847, %v1850
        %vm1852 = vweird.f32 %v1680
        %vm1853 = vweird.f32 %v1847
        %vm1854 = vmor %vm1852, %vm1853
        %v1855 = vsel %vm1854, %v1847, %v1851
        %v1856 = vand.u32 2147483647, %v1680
        %vm1857 = vcmp.eq.f32.partialorder %v1856, 8.507059e+37
        %v1858 = vand.u32 %v1680, 2147483648
        %v1859 = vor.u32 1.1754944e-38, %v1858
        %v1860 = vsel %vm1857, %v1859, %v1855
        %v1861 = vmul.f32 1.0, %v1860
        %v1862 = vrcp.pop %v1681
        %v1863 = vmul.f32 %v1681, %v1862
        %v1864 = vsub.f32 1.0, %v1863
        %v1865 = vmul.f32 %v1862, %v1864
        %v1866 = vadd.f32 %v1862, %v1865
        %vm1867 = vweird.f32 %v1681
        %vm1868 = vweird.f32 %v1862
        %vm1869 = vmor %vm1867, %vm1868
        %v1870 = vsel %vm1869, %v1862, %v1866
        %v1871 = vand.u32 2147483647, %v1681
        %vm1872 = vcmp.eq.f32.partialorder %v1871, 8.507059e+37
        %v1873 = vand.u32 %v1681, 2147483648
        %v1874 = vor.u32 1.1754944e-38, %v1873
        %v1875 = vsel %vm1872, %v1874, %v1870
        %v1876 = vmul.f32 1.0, %v1875
        %v1877 = vsub.f32 %v1696, %v1449
        %v1878 = vsub.f32 %v1711, %v1464
        %v1879 = vsub.f32 %v1726, %v1479
        %v1880 = vsub.f32 %v1741, %v1494
        %v1881 = vsub.f32 %v1756, %v1509
        %v1882 = vsub.f32 %v1771, %v1524
        %v1883 = vsub.f32 %v1786, %v1539
        %v1884 = vsub.f32 %v1801, %v1554
        %v1885 = vsub.f32 %v1816, %v1569
        %v1886 = vsub.f32 %v1831, %v1584
        %v1887 = vsub.f32 %v1846, %v1599
        %v1888 = vsub.f32 %v1861, %v1614
        %v1889 = vsub.f32 %v1876, %v1629
        %v1890 = vadd.f32 %v1877, 0.8
        %v1891 = vadd.f32 %v1878, 0.8
        %v1892 = vadd.f32 %v1879, 0.8
        %v1893 = vadd.f32 %v1880, 0.8
        %v1894 = vadd.f32 %v1881, 0.8
        %v1895 = vadd.f32 %v1882, 0.8
        %v1896 = vadd.f32 %v1883, 0.8
        %v1897 = vadd.f32 %v1884, 0.8
        %v1898 = vadd.f32 %v1885, 0.8
        %v1899 = vadd.f32 %v1886, 0.8
        %v1900 = vadd.f32 %v1887, 0.8
        %v1901 = vadd.f32 %v1888, 0.8
        %v1902 = vadd.f32 %v1889, 0.8
        %v1903 = vmax.f32 %v1890, 0.0
        %v1904 = vmax.f32 %v1891, 0.0
        %v1905 = vmax.f32 %v1892, 0.0
        %v1906 = vmax.f32 %v1893, 0.0
        %v1907 = vmax.f32 %v1894, 0.0
        %v1908 = vmax.f32 %v1895, 0.0
        %v1909 = vmax.f32 %v1896, 0.0
        %v1910 = vmax.f32 %v1897, 0.0
        %v1911 = vmax.f32 %v1898, 0.0
        %v1912 = vmax.f32 %v1899, 0.0
        %v1913 = vmax.f32 %v1900, 0.0
        %v1914 = vmax.f32 %v1901, 0.0
        %v1915 = vmax.f32 %v1902, 0.0
        %p1916 = scmp.ne.s32.totalorder %s23, 1
        // Predicated region
        $region45: #{tpu_custom_call.1} parent=31 // pred_check
          %p1917 = pneg %p1916
        $region46: #{tpu_custom_call.1} parent=31 // pred_check_branch
          %1919 = sbr.rel (%p1917) target = $region48
        $region47: #{tpu_custom_call.1} parent=31 // pred_region
          %vm1920 = vcmask 7168
          %v1921 = vsel %vm1920, %v1903, 0.0
          %v1922 = vsel %vm1920, %v1904, 0.0
          %v1923 = vadd.f32 %v1921, %v1922
          %v1924 = vsel %vm1920, %v1905, 0.0
          %v1925 = vadd.f32 %v1923, %v1924
          %v1926 = vsel %vm1920, %v1906, 0.0
          %v1927 = vadd.f32 %v1925, %v1926
          %v1928 = vsel %vm1920, %v1907, 0.0
          %v1929 = vadd.f32 %v1927, %v1928
          %v1930 = vsel %vm1920, %v1908, 0.0
          %v1931 = vadd.f32 %v1929, %v1930
          %v1932 = vsel %vm1920, %v1909, 0.0
          %v1933 = vadd.f32 %v1931, %v1932
          %v1934 = vsel %vm1920, %v1910, 0.0
          %v1935 = vadd.f32 %v1933, %v1934
          %v1936 = vsel %vm1920, %v1911, 0.0
          %v1937 = vadd.f32 %v1935, %v1936
          %v1938 = vsel %vm1920, %v1912, 0.0
          %v1939 = vadd.f32 %v1937, %v1938
          %v1940 = vsel %vm1920, %v1913, 0.0
          %v1941 = vadd.f32 %v1939, %v1940
          %v1942 = vsel %vm1920, %v1914, 0.0
          %v1943 = vadd.f32 %v1941, %v1942
          %v1944 = vsel %vm1920, %v1915, 0.0
          %v1945 = vadd.f32 %v1943, %v1944
          %1946 = vadd.xlane.f32.xlu0 %v1945
          %v1947 = vpop.xlane.xlu0 %1946
          %v1948 = vrot.slane %v1947, 4
          %v1949 = vadd.f32 %v1947, %v1948
          %v1950 = vrot.slane %v1949, 2
          %v1951 = vadd.f32 %v1949, %v1950
          %v1952 = vrot.slane %v1951, 1
          %v1953 = vadd.f32 %v1951, %v1952
          %s1954 = vtos %v1953
          %v1955 = vstv %s1954
          %1956 = vst [vmem:[%s292] sm:$0xff] %v1955
        $region48: #{tpu_custom_call.1} parent=31 // pred_fallthru
          _
        %p1957 = scmp.eq.s32.totalorder %s23, 1
        // Predicated region
        $region49: #{tpu_custom_call.1} parent=31 // pred_check
          %p1958 = pneg %p1957
        $region50: #{tpu_custom_call.1} parent=31 // pred_check_branch
          %1960 = sbr.rel (%p1958) target = $region52
        $region51: #{tpu_custom_call.1} parent=31 // pred_region
          %v1961 = vlaneseq
          %v1962 = vshrl.u32 %v1961, 7
          %v1963 = vadd.s32 %v1962, 8
          %v1964 = vadd.s32 %v1962, 16
          %v1965 = vadd.s32 %v1962, 24
          %v1966 = vadd.s32 %v1962, 32
          %v1967 = vadd.s32 %v1962, 40
          %v1968 = vadd.s32 %v1962, 48
          %v1969 = vadd.s32 %v1962, 56
          %v1970 = vadd.s32 %v1962, 64
          %v1971 = vadd.s32 %v1962, 72
          %v1972 = vadd.s32 %v1962, 80
          %v1973 = vadd.s32 %v1962, 88
          %v1974 = vadd.s32 %v1962, 96
          %vm1975 = vcmp.lt.s32.totalorder %v1962, 96
          %vm1976 = vcmp.lt.s32.totalorder %v1963, 96
          %vm1977 = vcmp.lt.s32.totalorder %v1964, 96
          %vm1978 = vcmp.lt.s32.totalorder %v1965, 96
          %vm1979 = vcmp.lt.s32.totalorder %v1966, 96
          %vm1980 = vcmp.lt.s32.totalorder %v1967, 96
          %vm1981 = vcmp.lt.s32.totalorder %v1968, 96
          %vm1982 = vcmp.lt.s32.totalorder %v1969, 96
          %vm1983 = vcmp.lt.s32.totalorder %v1970, 96
          %vm1984 = vcmp.lt.s32.totalorder %v1971, 96
          %vm1985 = vcmp.lt.s32.totalorder %v1972, 96
          %vm1986 = vcmp.lt.s32.totalorder %v1973, 96
          %vm1987 = vcmp.lt.s32.totalorder %v1974, 96
          %v1988 = vsel %vm1975, %v1903, 0.0
          %v1989 = vsel %vm1976, %v1904, 0.0
          %v1990 = vsel %vm1977, %v1905, 0.0
          %v1991 = vsel %vm1978, %v1906, 0.0
          %v1992 = vsel %vm1979, %v1907, 0.0
          %v1993 = vsel %vm1980, %v1908, 0.0
          %v1994 = vsel %vm1981, %v1909, 0.0
          %v1995 = vsel %vm1982, %v1910, 0.0
          %v1996 = vsel %vm1983, %v1911, 0.0
          %v1997 = vsel %vm1984, %v1912, 0.0
          %v1998 = vsel %vm1985, %v1913, 0.0
          %v1999 = vsel %vm1986, %v1914, 0.0
          %v2000 = vsel %vm1987, %v1915, 0.0
          %vm2001 = vcmask 7168
          %v2002 = vsel %vm2001, %v1988, 0.0
          %v2003 = vsel %vm2001, %v1989, 0.0
          %v2004 = vadd.f32 %v2002, %v2003
          %v2005 = vsel %vm2001, %v1990, 0.0
          %v2006 = vadd.f32 %v2004, %v2005
          %v2007 = vsel %vm2001, %v1991, 0.0
          %v2008 = vadd.f32 %v2006, %v2007
          %v2009 = vsel %vm2001, %v1992, 0.0
          %v2010 = vadd.f32 %v2008, %v2009
          %v2011 = vsel %vm2001, %v1993, 0.0
          %v2012 = vadd.f32 %v2010, %v2011
          %v2013 = vsel %vm2001, %v1994, 0.0
          %v2014 = vadd.f32 %v2012, %v2013
          %v2015 = vsel %vm2001, %v1995, 0.0
          %v2016 = vadd.f32 %v2014, %v2015
          %v2017 = vsel %vm2001, %v1996, 0.0
          %v2018 = vadd.f32 %v2016, %v2017
          %v2019 = vsel %vm2001, %v1997, 0.0
          %v2020 = vadd.f32 %v2018, %v2019
          %v2021 = vsel %vm2001, %v1998, 0.0
          %v2022 = vadd.f32 %v2020, %v2021
          %v2023 = vsel %vm2001, %v1999, 0.0
          %v2024 = vadd.f32 %v2022, %v2023
          %v2025 = vsel %vm2001, %v2000, 0.0
          %v2026 = vadd.f32 %v2024, %v2025
          %2027 = vadd.xlane.f32.xlu0 %v2026
          %v2028 = vpop.xlane.xlu0 %2027
          %v2029 = vrot.slane %v2028, 4
          %v2030 = vadd.f32 %v2028, %v2029
          %v2031 = vrot.slane %v2030, 2
          %v2032 = vadd.f32 %v2030, %v2031
          %v2033 = vrot.slane %v2032, 1
          %v2034 = vadd.f32 %v2032, %v2033
          %s2035 = vtos %v2034
          %v2036 = vstv %s2035
          %2037 = vst [vmem:[%s292] sm:$0xff] %v2036
        $region52: #{tpu_custom_call.1} parent=31 // pred_fallthru
          _
        %s2038 = sand.u32 %s109, 1
        %s2039 = scalar_lea.sflag [#allocation4], %s2038
        %s2040 = sand.u32 %s109, 1
        %s2041 = smul.addr %s2040, 8
        %s2042 = scalar_lea.vmem [#allocation8], %s2041
        // Predicated region
        $region53: #{tpu_custom_call.1} parent=31 // pred_check
          %p2043 = pneg %p119
        $region54: #{tpu_custom_call.1} parent=31 // pred_check_branch
          %2045 = sbr.rel (%p2043) target = $region56
        $region55: #{tpu_custom_call.1} parent=31 // pred_region
          %2047 = vsyncadd %s2039, 0
          %s2048 = smul.addr %s23, 8
          %s2049 = scalar_lea.hbm %s3, %s2048
          %s2051 = sshll.u32 %s2042, 4
          %s2052 = int_to_ptr.vmem [resolvable:$true] %s2051
          %s2053 = sshll.u32 %s2049, 4
          %s2054 = int_to_ptr.hbm [resolvable:$true] %s2053
          %2056 = dma.vmem_to_hbm [thread:$0]  %s2052, 128, %s2054, %s2039
        $region56: #{tpu_custom_call.1} parent=31 // pred_fallthru
          _
      $region32: #{tpu_custom_call.1} parent=5 // pred_fallthru
        _
      %p2057 = scmp.le.s32.totalorder 2, %s18
      // Predicated region
      $region57: #{tpu_custom_call.1} parent=5 // pred_check
        %p2058 = pneg %p2057
      $region58: #{tpu_custom_call.1} parent=5 // pred_check_branch
        %2060 = sbr.rel (%p2058) target = $region60
      $region59: #{tpu_custom_call.1} parent=5 // pred_region
        %s2061 = ssub.s32 %s18, 2
        // Predicated region
        $region61: #{tpu_custom_call.1} parent=59 // pred_check
          %p2062 = pneg %p125
        $region62: #{tpu_custom_call.1} parent=59 // pred_check_branch
          %2064 = sbr.rel (%p2062) target = $region64
        $region63: #{tpu_custom_call.1} parent=59 // pred_region
          %s2065 = sand.u32 %s110, 1
          %s2066 = scalar_lea.sflag [#allocation4], %s2065
          %s2067 = sand.u32 %s110, 1
          %s2068 = smul.addr %s2067, 8
          %s2069 = scalar_lea.vmem [#allocation8], %s2068
          %2071 = dma.done %s2066, 128
        $region64: #{tpu_custom_call.1} parent=59 // pred_fallthru
          _
      $region60: #{tpu_custom_call.1} parent=5 // pred_fallthru
        _
    $region6: #{tpu_custom_call.1} parent=1 // loop_footer
      %s22 = sadd.s32 1, %s18
    $region7: #{tpu_custom_call.1} parent=1 // loop_footer_branch
      %17 = sbr.rel target = $region3
    $region8: #{tpu_custom_call.1} parent=1 // loop_exit
      _
    %2072 = vsyncpa [#allocation3], 1
    %s2073 = scalar_lea.sflag [#allocation3], 1
    %2074 = vsyncpa %s2073, 1
    %2075 = vsyncpa [#allocation6], 1
    %s2076 = scalar_lea.sflag [#allocation6], 1
    %2077 = vsyncpa %s2076, 1
    %2078 = vsyncpa [#allocation4], 1
    %s2079 = scalar_lea.sflag [#allocation4], 1
    %2080 = vsyncpa %s2079, 1

</llo_original>
